<compile_context>
chip_gen: v6e
topology: v6e:2x2x1
jax: 0.10.0
libtpu: 0.0.40
codegen_flags: <defaults>
</compile_context>

<pallas_src>
import functools

import jax
import jax.numpy as jnp
from jax.experimental import pallas as pl
from jax.experimental.pallas import tpu as pltpu


def _round_up(x, m):
    return (x + m - 1) // m * m


# ----------------------------------------------------------------------------
# Pallas kernel: fused weight-normed MLP (relu hidden layers, final tanh)
# ----------------------------------------------------------------------------
def _mlp_kernel(x_ref, *refs, num_layers):
    # refs = (w0, b0, w1, b1, ..., w_{L-1}, b_{L-1}, o)
    o_ref = refs[-1]
    wb = refs[:-1]

    # Layer 0: input is already packed (points|view|normals|features) and bf16,
    # so this is a single K=41 MXU matmul with f32 accumulation.
    h = jnp.dot(x_ref[...], wb[0][...], preferred_element_type=jnp.float32)
    h = h + wb[1][...]
    h = jnp.maximum(h, 0.0) if num_layers > 1 else jnp.tanh(h)

    # Remaining layers (ReLU except for the last, which gets tanh).
    # Activations / bias adds stay f32 (v5e has no bf16 VPU/EUP); only the MXU
    # operand is cast to bf16.
    for l in range(1, num_layers):
        w = wb[2 * l][...]
        b = wb[2 * l + 1][...]
        h = jnp.dot(h.astype(jnp.bfloat16), w,
                    preferred_element_type=jnp.float32) + b
        h = jnp.maximum(h, 0.0) if l < num_layers - 1 else jnp.tanh(h)

    o_ref[...] = h.astype(o_ref.dtype)


def _mlp_pallas(x, ws, bs, tile_n, out_dtype):
    """x: (n, d_in) bf16 packed input; ws[l]: (d_l, d_{l+1}) bf16;
    bs[l]: (1, d_{l+1}) f32."""
    n, d_in = x.shape
    num_layers = len(bs)
    d_out = bs[-1].shape[1]
    grid = (pl.cdiv(n, tile_n),)  # ragged last block handled by Pallas

    in_specs = [pl.BlockSpec((tile_n, d_in), lambda i: (i, 0))]
    args = [x]
    for w, b in zip(ws, bs):
        # Grid-invariant weights/biases (constant index_map). They total <50 KiB
        # so default buffering is fine.  TODO(synk): pipeline_mode=pl.Buffered(1)
        # would shave the duplicate buffer once single-buffered specs are stable.
        in_specs.append(pl.BlockSpec(w.shape, lambda i: (0, 0)))
        args.append(w)
        in_specs.append(pl.BlockSpec(b.shape, lambda i: (0, 0)))
        args.append(b)

    flops = int(2 * n * sum(w.shape[0] * w.shape[1] for w in ws))
    bytes_accessed = int(
        sum(int(a.size) * a.dtype.itemsize for a in args)
        + n * d_out * jnp.dtype(out_dtype).itemsize)
    cost = pl.CostEstimate(flops=flops,
                           transcendentals=int(n * d_out),
                           bytes_accessed=bytes_accessed)

    kernel = functools.partial(_mlp_kernel, num_layers=num_layers)
    return pl.pallas_call(
        kernel,
        grid=grid,
        in_specs=in_specs,
        out_specs=pl.BlockSpec((tile_n, d_out), lambda i: (i, 0)),
        out_shape=jax.ShapeDtypeStruct((n, d_out), out_dtype),
        compiler_params=pltpu.CompilerParams(
            dimension_semantics=("parallel",),
            vmem_limit_bytes=32 * 1024 * 1024),
        cost_estimate=cost,
    )(*args)


# ----------------------------------------------------------------------------
# Parameter init (deterministic), mimicking nn.Linear + nn.utils.weight_norm
# ----------------------------------------------------------------------------
def init_params(key, feature_vector_size, d_in, d_out, dims):
    layer_dims = [d_in + feature_vector_size] + list(dims) + [d_out]
    params = []
    for l in range(len(layer_dims) - 1):
        in_d, out_d = layer_dims[l], layer_dims[l + 1]
        key, k_v, k_b = jax.random.split(key, 3)
        bound = 1.0 / jnp.sqrt(jnp.float32(in_d))
        v = jax.random.uniform(k_v, (out_d, in_d), jnp.float32, -bound, bound)
        # weight_norm init: g = ||v|| per output row (so W_eff == v initially)
        g = jnp.sqrt(jnp.sum(v * v, axis=1, keepdims=True))
        b = jax.random.uniform(k_b, (out_d,), jnp.float32, -bound, bound)
        params.append((v, g, b))
    return params


def _effective_weight(v, g):
    # nn.utils.weight_norm (dim=0): W = g * v / ||v||, norm over the input dim.
    norm = jnp.sqrt(jnp.sum(v * v, axis=1, keepdims=True))
    return g * v / norm  # (out, in)


def prepare_params(params):
    """Hoisted out of the per-call path: resolve weight_norm, transpose to
    (in, out), cast weights to bf16.  Layer-0 weight is kept as one block so
    layer 0 is a single matmul against the packed input."""
    ws, bs = [], []
    for v, g, b in params:
        w = _effective_weight(v, g).T  # (in, out)
        ws.append(jnp.asarray(w, jnp.bfloat16))
        bs.append(jnp.asarray(b, jnp.float32).reshape(1, -1))
    return {'ws': tuple(ws), 'bs': tuple(bs)}


def _concat_input(points, normals, view_dirs, feature_vectors, mode):
    if mode == 'idr':
        return jnp.concatenate([points, view_dirs, normals, feature_vectors], axis=-1)
    elif mode == 'no_view_dir':
        return jnp.concatenate([points, normals, feature_vectors], axis=-1)
    elif mode == 'no_normal':
        return jnp.concatenate([points, view_dirs, feature_vectors], axis=-1)
    raise ValueError(mode)


def _pick_tile(n, tile_n):
    """Row-tile size: big enough to amortize per-step overhead, clamped so the
    grid has >= 2 steps when n > 256 (feeds both v7x TensorCores), and always a
    legal TPU block (multiple of 8 or equal to the full row count)."""
    if n <= 256:
        return n  # single block; block dim == full array dim is always legal
    t = min(tile_n, _round_up(n, 128))
    t = min(t, _round_up((n + 1) // 2, 128))   # >= 2 grid steps (v7x megacore)
    return _round_up(t, 8)


# ----------------------------------------------------------------------------
# Forward wrapper
# ----------------------------------------------------------------------------
def rendering_network_forward(points, normals, view_dirs, feature_vectors,
                              prepared, ratio, mode='idr', tile_n=2048):
    _ = ratio['renderRatio']  # unused for multires_v = multires_n = 0 config
    # TODO(synk): positional embedding (get_embedder) + utils.annealing_weights
    # are external helpers not provided; this kernel targets the
    # multires_v=0 / multires_n=0 configuration (embed fns are None).

    # Pack all inputs into one lane-dense array and store it bf16 (cast once
    # here): one DMA stream per tile, half the input HBM bytes, and layer 0
    # becomes a single matmul.  No row padding: the kernel grid handles the
    # ragged last block.
    x = _concat_input(points, normals, view_dirs, feature_vectors, mode)
    x = x.astype(jnp.bfloat16)

    n = x.shape[0]
    tn = _pick_tile(n, tile_n)
    return _mlp_pallas(x, prepared['ws'], prepared['bs'], tn,
                       out_dtype=points.dtype)


# ----------------------------------------------------------------------------
# Pure-JAX f32 reference for verification
# ----------------------------------------------------------------------------
def reference_forward(points, normals, view_dirs, feature_vectors, params, mode='idr'):
    x = _concat_input(points, normals, view_dirs, feature_vectors, mode)
    num_layers = len(params)
    for l, (v, g, b) in enumerate(params):
        w = _effective_weight(v, g)
        x = x @ w.T + b
        if l < num_layers - 1:
            x = jnp.maximum(x, 0.0)
    return jnp.tanh(x)


if __name__ == "__main__":
    key = jax.random.PRNGKey(0)
    num_points = 500                    # exercises a 2-step grid + ragged edge
    feature_vector_size = 32
    d_in, d_out = 9, 3                  # points(3) + view_dirs(3) + normals(3)
    hidden_dims = [128, 128]
    mode = 'idr'

    k_p, k_n, k_v, k_f, k_w = jax.random.split(key, 5)
    points = jax.random.normal(k_p, (num_points, 3), jnp.float32)
    normals = jax.random.normal(k_n, (num_points, 3), jnp.float32)
    view_dirs = jax.random.normal(k_v, (num_points, 3), jnp.float32)
    feature_vectors = jax.random.normal(k_f, (num_points, feature_vector_size),
                                        jnp.float32)
    params = init_params(k_w, feature_vector_size, d_in, d_out, hidden_dims)
    # Done once (not per forward call): weight-norm resolve, transpose, bf16 cast.
    prepared = prepare_params(params)
    ratio = {'renderRatio': 1.0}

    out = rendering_network_forward(points, normals, view_dirs, feature_vectors,
                                    prepared, ratio, mode=mode, tile_n=2048)
    out = jax.block_until_ready(out)

    ref = reference_forward(points, normals, view_dirs, feature_vectors,
                            params, mode=mode)
    assert out.shape == (num_points, d_out), out.shape
    max_err = float(jnp.max(jnp.abs(out - ref)))
    # bf16 matmul operands (f32 accumulation) vs. f32 reference -> loosened tol.
    assert jnp.allclose(out, ref, atol=5e-2, rtol=5e-2), max_err
    print("KERNEL_OK")
</pallas_src>

<mosaic_0001>
module attributes {stable_mosaic.version = 11 : i64} {
  func.func @_mlp_kernel(%arg0: i32, %arg1: memref<256x41xbf16, #tpu.memory_space<vmem>>, %arg2: memref<41x128xbf16, #tpu.memory_space<vmem>>, %arg3: memref<1x128xf32, #tpu.memory_space<vmem>>, %arg4: memref<128x128xbf16, #tpu.memory_space<vmem>>, %arg5: memref<1x128xf32, #tpu.memory_space<vmem>>, %arg6: memref<128x3xbf16, #tpu.memory_space<vmem>>, %arg7: memref<1x3xf32, #tpu.memory_space<vmem>>, %arg8: memref<256x3xf32, #tpu.memory_space<vmem>>) attributes {dimension_semantics = [#tpu.dimension_semantics<parallel>], iteration_bounds = array<i64: 2>, scalar_prefetch = 0 : i64, scratch_operands = 0 : i64, tpu.core_type = #tpu.core_type<tc>, window_params = [{transform_indices = @transform_0, window_bounds = array<i64: 256, 41>}, {pipeline_mode = #tpu.pipeline_mode<synchronous>, transform_indices = @transform_1, window_bounds = array<i64: 41, 128>}, {pipeline_mode = #tpu.pipeline_mode<synchronous>, transform_indices = @transform_2, window_bounds = array<i64: 1, 128>}, {pipeline_mode = #tpu.pipeline_mode<synchronous>, transform_indices = @transform_3, window_bounds = array<i64: 128, 128>}, {pipeline_mode = #tpu.pipeline_mode<synchronous>, transform_indices = @transform_4, window_bounds = array<i64: 1, 128>}, {pipeline_mode = #tpu.pipeline_mode<synchronous>, transform_indices = @transform_5, window_bounds = array<i64: 128, 3>}, {pipeline_mode = #tpu.pipeline_mode<synchronous>, transform_indices = @transform_6, window_bounds = array<i64: 1, 3>}, {transform_indices = @transform_7, window_bounds = array<i64: 256, 3>}]} {
    %c0 = arith.constant 0 : index
    %c0_0 = arith.constant 0 : index
    %0 = vector.load %arg1[%c0, %c0_0] : memref<256x41xbf16, #tpu.memory_space<vmem>>, vector<256x41xbf16>
    %c0_1 = arith.constant 0 : index
    %c0_2 = arith.constant 0 : index
    %1 = vector.load %arg2[%c0_1, %c0_2] : memref<41x128xbf16, #tpu.memory_space<vmem>>, vector<41x128xbf16>
    %cst = arith.constant dense<0.000000e+00> : vector<256x128xf32>
    %2 = tpu.matmul %0, %1, %cst {dimension_numbers = #tpu.dot_dimension_numbers<[1], [0], [0], [1], [0, 0, 1, 1], [], []>} : vector<256x41xbf16>, vector<41x128xbf16>, vector<256x128xf32> -> vector<256x128xf32>
    %c0_3 = arith.constant 0 : index
    %c0_4 = arith.constant 0 : index
    %3 = vector.load %arg3[%c0_3, %c0_4] : memref<1x128xf32, #tpu.memory_space<vmem>>, vector<1x128xf32>
    %4 = vector.broadcast %3 : vector<1x128xf32> to vector<256x128xf32>
    %5 = arith.addf %2, %4 : vector<256x128xf32>
    %cst_5 = arith.constant 0.000000e+00 : f32
    %6 = vector.broadcast %cst_5 : f32 to vector<256x128xf32>
    %7 = arith.maximumf %5, %6 : vector<256x128xf32>
    %c0_6 = arith.constant 0 : index
    %c0_7 = arith.constant 0 : index
    %8 = vector.load %arg4[%c0_6, %c0_7] : memref<128x128xbf16, #tpu.memory_space<vmem>>, vector<128x128xbf16>
    %c0_8 = arith.constant 0 : index
    %c0_9 = arith.constant 0 : index
    %9 = vector.load %arg5[%c0_8, %c0_9] : memref<1x128xf32, #tpu.memory_space<vmem>>, vector<1x128xf32>
    %10 = arith.truncf %7 : vector<256x128xf32> to vector<256x128xbf16>
    %cst_10 = arith.constant dense<0.000000e+00> : vector<256x128xf32>
    %11 = tpu.matmul %10, %8, %cst_10 {dimension_numbers = #tpu.dot_dimension_numbers<[1], [0], [0], [1], [0, 0, 1, 1], [], []>} : vector<256x128xbf16>, vector<128x128xbf16>, vector<256x128xf32> -> vector<256x128xf32>
    %12 = vector.broadcast %9 : vector<1x128xf32> to vector<256x128xf32>
    %13 = arith.addf %11, %12 : vector<256x128xf32>
    %cst_11 = arith.constant 0.000000e+00 : f32
    %14 = vector.broadcast %cst_11 : f32 to vector<256x128xf32>
    %15 = arith.maximumf %13, %14 : vector<256x128xf32>
    %c0_12 = arith.constant 0 : index
    %c0_13 = arith.constant 0 : index
    %16 = vector.load %arg6[%c0_12, %c0_13] : memref<128x3xbf16, #tpu.memory_space<vmem>>, vector<128x3xbf16>
    %c0_14 = arith.constant 0 : index
    %c0_15 = arith.constant 0 : index
    %17 = vector.load %arg7[%c0_14, %c0_15] : memref<1x3xf32, #tpu.memory_space<vmem>>, vector<1x3xf32>
    %18 = arith.truncf %15 : vector<256x128xf32> to vector<256x128xbf16>
    %cst_16 = arith.constant dense<0.000000e+00> : vector<256x3xf32>
    %19 = tpu.matmul %18, %16, %cst_16 {dimension_numbers = #tpu.dot_dimension_numbers<[1], [0], [0], [1], [0, 0, 1, 1], [], []>} : vector<256x128xbf16>, vector<128x3xbf16>, vector<256x3xf32> -> vector<256x3xf32>
    %20 = vector.broadcast %17 : vector<1x3xf32> to vector<256x3xf32>
    %21 = arith.addf %19, %20 : vector<256x3xf32>
    %22 = math.tanh %21 : vector<256x3xf32>
    %c0_17 = arith.constant 0 : index
    %c0_18 = arith.constant 0 : index
    %23 = vector.load %arg8[%c0_17, %c0_18] : memref<256x3xf32, #tpu.memory_space<vmem>>, vector<256x3xf32>
    tpu.vector_store %arg8[%c0_17, %c0_18], %22 {strides = array<i32>} : memref<256x3xf32, #tpu.memory_space<vmem>>, vector<256x3xf32>,
    return
  }
  func.func @transform_0(%arg0: i32) -> (i32, i32) {
    %c0_i32 = arith.constant 0 : i32
    %c0_i32_0 = arith.constant 0 : i32
    return %arg0, %c0_i32 : i32, i32
  }
  func.func @transform_1(%arg0: i32) -> (i32, i32) {
    %c0_i32 = arith.constant 0 : i32
    %c0_i32_0 = arith.constant 0 : i32
    %c0_i32_1 = arith.constant 0 : i32
    return %c0_i32, %c0_i32_0 : i32, i32
  }
  func.func @transform_2(%arg0: i32) -> (i32, i32) {
    %c0_i32 = arith.constant 0 : i32
    %c0_i32_0 = arith.constant 0 : i32
    %c0_i32_1 = arith.constant 0 : i32
    return %c0_i32, %c0_i32_0 : i32, i32
  }
  func.func @transform_3(%arg0: i32) -> (i32, i32) {
    %c0_i32 = arith.constant 0 : i32
    %c0_i32_0 = arith.constant 0 : i32
    %c0_i32_1 = arith.constant 0 : i32
    return %c0_i32, %c0_i32_0 : i32, i32
  }
  func.func @transform_4(%arg0: i32) -> (i32, i32) {
    %c0_i32 = arith.constant 0 : i32
    %c0_i32_0 = arith.constant 0 : i32
    %c0_i32_1 = arith.constant 0 : i32
    return %c0_i32, %c0_i32_0 : i32, i32
  }
  func.func @transform_5(%arg0: i32) -> (i32, i32) {
    %c0_i32 = arith.constant 0 : i32
    %c0_i32_0 = arith.constant 0 : i32
    %c0_i32_1 = arith.constant 0 : i32
    return %c0_i32, %c0_i32_0 : i32, i32
  }
  func.func @transform_6(%arg0: i32) -> (i32, i32) {
    %c0_i32 = arith.constant 0 : i32
    %c0_i32_0 = arith.constant 0 : i32
    %c0_i32_1 = arith.constant 0 : i32
    return %c0_i32, %c0_i32_0 : i32, i32
  }
  func.func @transform_7(%arg0: i32) -> (i32, i32) {
    %c0_i32 = arith.constant 0 : i32
    %c0_i32_0 = arith.constant 0 : i32
    return %arg0, %c0_i32 : i32, i32
  }
}

</mosaic_0001>

<llo_original>
// kernel: tpu_custom_call.1
$region0: #{tpu_custom_call.1}
  #allocation0 [shape = 'u32[]', space=smem, size = 0x4, offset = 0x4, fixed_abs, tag = 'smem constant byte address 0x4 - core index']
  #allocation1 [shape = 'u32[144,128]{1,0:T(1,128)}', space=vmem, size = 0x12000, scoped, tag = 'internal scratch']
  %s0 = inlined_call_operand.vmem [shape: bf16[500,41], index: 0, kind: input, shape index: {}]
  %s1 = inlined_call_operand.vmem [shape: bf16[41,128], index: 1, kind: input, shape index: {}]
  %s2 = inlined_call_operand.vmem [shape: f32[1,128], index: 2, kind: input, shape index: {}]
  %s3 = inlined_call_operand.vmem [shape: bf16[128,128], index: 3, kind: input, shape index: {}]
  %s4 = inlined_call_operand.vmem [shape: f32[1,128], index: 4, kind: input, shape index: {}]
  %s5 = inlined_call_operand.vmem [shape: bf16[128,3], index: 5, kind: input, shape index: {}]
  %s6 = inlined_call_operand.vmem [shape: f32[1,3], index: 6, kind: input, shape index: {}]
  %s7 = inlined_call_operand.vmem [shape: f32[500,3], index: 7, kind: output, shape index: {}]
  %s8 = sld [smem:[#allocation0]]
  $region109: #{tpu_custom_call.1} parent=0
    _
  %s10 = ssub.s32 1, %s8
  %s11 = scalar_select 0, %s10, %s8
  $region1: #{tpu_custom_call.1} parent=0
    #allocation2 [shape = 'u8[262144]{0}', space=vmem, size = 0x40000, scoped, tag = 'output window, operand 0']
    loop: start=0, step=1, limit=4
    $region2: #{tpu_custom_call.1} parent=1 // loop_pre_header
      _
    $region3: #{tpu_custom_call.1} parent=1 // loop_header
      %s13 = sphi 0, %s17
      %p14 = scmp.ge.s32.totalorder %s13, 4
      %s23 = sphi 0, %s25
      %s26 = sphi 0, %s23
      %s27 = sphi 0, %s26
      %s43 = sphi 0, %s27
      %s47 = sphi 0, %s47
      %s49 = sphi 0, %s47
      %s50 = sphi 0, %s49
      %s64 = sphi 0, %s50
      %s68 = sphi 0, %s68
      %s70 = sphi 0, %s68
      %s71 = sphi 0, %s70
      %s85 = sphi 0, %s71
      %s89 = sphi 0, %s89
      %s91 = sphi 0, %s89
      %s92 = sphi 0, %s91
      %s106 = sphi 0, %s92
      %s110 = sphi 0, %s110
      %s112 = sphi 0, %s110
      %s113 = sphi 0, %s112
      %s127 = sphi 0, %s113
      %s131 = sphi 0, %s131
      %s133 = sphi 0, %s131
      %s134 = sphi 0, %s133
      %s148 = sphi 0, %s134
      %s152 = sphi 0, %s152
      %s154 = sphi 0, %s152
      %s155 = sphi 0, %s154
      %s169 = sphi 0, %s155
      %s175 = sphi 0, %s177
      %s178 = sphi 0, %s175
      %s179 = sphi 0, %s178
      %s195 = sphi 0, %s179
    $region4: #{tpu_custom_call.1} parent=1 // loop_header_branch
      %16 = sbr.rel (%p14) target = $region8
    $region5: #{tpu_custom_call.1} parent=1 // loop_body
      %s18 = ssub.s32 %s13, 1
      %s19 = ssub.s32 %s13, 2
      %s20 = sadd.s32 %s13, 1
      %s21 = ssub.s32 %s13, %s20
      %p22 = scmp.eq.s32.totalorder %s21, 0
      %s24 = sadd.s32 %s23, 1
      %s25 = scalar_select %p22, %s23, %s24
      %p28 = pneg %p22
      %p29 = scmp.eq.s32.totalorder %s13, 1
      %p30 = por %p28, %p29
      %p31 = scmp.ne.s32.totalorder %s23, %s26
      %p32 = scmp.eq.s32.totalorder %s13, 0
      %p33 = por %p31, %p32
      %p34 = scmp.ne.s32.totalorder %s23, %s26
      %p35 = scmp.eq.s32.totalorder %s18, 1
      %p36 = por %p34, %p35
      %p37 = scmp.ne.s32.totalorder %s26, %s27
      %p38 = scmp.eq.s32.totalorder %s18, 0
      %p39 = por %p37, %p38
      %p40 = scmp.ne.s32.totalorder %s26, %s27
      %p41 = scmp.eq.s32.totalorder %s19, 1
      %p42 = por %p40, %p41
      %p44 = scmp.ne.s32.totalorder %s27, %s43
      %p45 = scmp.eq.s32.totalorder %s19, 0
      %p46 = por %p44, %p45
      %s48 = sadd.s32 %s47, 1
      %p51 = scmp.eq.s32.totalorder %s13, 1
      %p52 = scmp.ne.s32.totalorder %s47, %s49
      %p53 = scmp.eq.s32.totalorder %s13, 0
      %p54 = por %p52, %p53
      %p55 = scmp.ne.s32.totalorder %s47, %s49
      %p56 = scmp.eq.s32.totalorder %s18, 1
      %p57 = por %p55, %p56
      %p58 = scmp.ne.s32.totalorder %s49, %s50
      %p59 = scmp.eq.s32.totalorder %s18, 0
      %p60 = por %p58, %p59
      %p61 = scmp.ne.s32.totalorder %s49, %s50
      %p62 = scmp.eq.s32.totalorder %s19, 1
      %p63 = por %p61, %p62
      %p65 = scmp.ne.s32.totalorder %s50, %s64
      %p66 = scmp.eq.s32.totalorder %s19, 0
      %p67 = por %p65, %p66
      %s69 = sadd.s32 %s68, 1
      %p72 = scmp.eq.s32.totalorder %s13, 1
      %p73 = scmp.ne.s32.totalorder %s68, %s70
      %p74 = scmp.eq.s32.totalorder %s13, 0
      %p75 = por %p73, %p74
      %p76 = scmp.ne.s32.totalorder %s68, %s70
      %p77 = scmp.eq.s32.totalorder %s18, 1
      %p78 = por %p76, %p77
      %p79 = scmp.ne.s32.totalorder %s70, %s71
      %p80 = scmp.eq.s32.totalorder %s18, 0
      %p81 = por %p79, %p80
      %p82 = scmp.ne.s32.totalorder %s70, %s71
      %p83 = scmp.eq.s32.totalorder %s19, 1
      %p84 = por %p82, %p83
      %p86 = scmp.ne.s32.totalorder %s71, %s85
      %p87 = scmp.eq.s32.totalorder %s19, 0
      %p88 = por %p86, %p87
      %s90 = sadd.s32 %s89, 1
      %p93 = scmp.eq.s32.totalorder %s13, 1
      %p94 = scmp.ne.s32.totalorder %s89, %s91
      %p95 = scmp.eq.s32.totalorder %s13, 0
      %p96 = por %p94, %p95
      %p97 = scmp.ne.s32.totalorder %s89, %s91
      %p98 = scmp.eq.s32.totalorder %s18, 1
      %p99 = por %p97, %p98
      %p100 = scmp.ne.s32.totalorder %s91, %s92
      %p101 = scmp.eq.s32.totalorder %s18, 0
      %p102 = por %p100, %p101
      %p103 = scmp.ne.s32.totalorder %s91, %s92
      %p104 = scmp.eq.s32.totalorder %s19, 1
      %p105 = por %p103, %p104
      %p107 = scmp.ne.s32.totalorder %s92, %s106
      %p108 = scmp.eq.s32.totalorder %s19, 0
      %p109 = por %p107, %p108
      %s111 = sadd.s32 %s110, 1
      %p114 = scmp.eq.s32.totalorder %s13, 1
      %p115 = scmp.ne.s32.totalorder %s110, %s112
      %p116 = scmp.eq.s32.totalorder %s13, 0
      %p117 = por %p115, %p116
      %p118 = scmp.ne.s32.totalorder %s110, %s112
      %p119 = scmp.eq.s32.totalorder %s18, 1
      %p120 = por %p118, %p119
      %p121 = scmp.ne.s32.totalorder %s112, %s113
      %p122 = scmp.eq.s32.totalorder %s18, 0
      %p123 = por %p121, %p122
      %p124 = scmp.ne.s32.totalorder %s112, %s113
      %p125 = scmp.eq.s32.totalorder %s19, 1
      %p126 = por %p124, %p125
      %p128 = scmp.ne.s32.totalorder %s113, %s127
      %p129 = scmp.eq.s32.totalorder %s19, 0
      %p130 = por %p128, %p129
      %s132 = sadd.s32 %s131, 1
      %p135 = scmp.eq.s32.totalorder %s13, 1
      %p136 = scmp.ne.s32.totalorder %s131, %s133
      %p137 = scmp.eq.s32.totalorder %s13, 0
      %p138 = por %p136, %p137
      %p139 = scmp.ne.s32.totalorder %s131, %s133
      %p140 = scmp.eq.s32.totalorder %s18, 1
      %p141 = por %p139, %p140
      %p142 = scmp.ne.s32.totalorder %s133, %s134
      %p143 = scmp.eq.s32.totalorder %s18, 0
      %p144 = por %p142, %p143
      %p145 = scmp.ne.s32.totalorder %s133, %s134
      %p146 = scmp.eq.s32.totalorder %s19, 1
      %p147 = por %p145, %p146
      %p149 = scmp.ne.s32.totalorder %s134, %s148
      %p150 = scmp.eq.s32.totalorder %s19, 0
      %p151 = por %p149, %p150
      %s153 = sadd.s32 %s152, 1
      %p156 = scmp.eq.s32.totalorder %s13, 1
      %p157 = scmp.ne.s32.totalorder %s152, %s154
      %p158 = scmp.eq.s32.totalorder %s13, 0
      %p159 = por %p157, %p158
      %p160 = scmp.ne.s32.totalorder %s152, %s154
      %p161 = scmp.eq.s32.totalorder %s18, 1
      %p162 = por %p160, %p161
      %p163 = scmp.ne.s32.totalorder %s154, %s155
      %p164 = scmp.eq.s32.totalorder %s18, 0
      %p165 = por %p163, %p164
      %p166 = scmp.ne.s32.totalorder %s154, %s155
      %p167 = scmp.eq.s32.totalorder %s19, 1
      %p168 = por %p166, %p167
      %p170 = scmp.ne.s32.totalorder %s155, %s169
      %p171 = scmp.eq.s32.totalorder %s19, 0
      %p172 = por %p170, %p171
      %s173 = ssub.s32 %s13, %s20
      %p174 = scmp.eq.s32.totalorder %s173, 0
      %s176 = sadd.s32 %s175, 1
      %s177 = scalar_select %p174, %s175, %s176
      %p180 = pneg %p174
      %p181 = scmp.eq.s32.totalorder %s13, 1
      %p182 = por %p180, %p181
      %p183 = scmp.ne.s32.totalorder %s175, %s178
      %p184 = scmp.eq.s32.totalorder %s13, 0
      %p185 = por %p183, %p184
      %p186 = scmp.ne.s32.totalorder %s175, %s178
      %p187 = scmp.eq.s32.totalorder %s18, 1
      %p188 = por %p186, %p187
      %p189 = scmp.ne.s32.totalorder %s178, %s179
      %p190 = scmp.eq.s32.totalorder %s18, 0
      %p191 = por %p189, %p190
      %p192 = scmp.ne.s32.totalorder %s178, %s179
      %p193 = scmp.eq.s32.totalorder %s19, 1
      %p194 = por %p192, %p193
      %p196 = scmp.ne.s32.totalorder %s179, %s195
      %p197 = scmp.eq.s32.totalorder %s19, 0
      %p198 = por %p196, %p197
      %p199 = scmp.le.s32.totalorder 1, %s13
      %p200 = scmp.lt.s32.totalorder %s13, 3
      %p201 = pnand %p199, %p200
      %p202 = pneg %p201
      // Predicated region
      $region9: #{tpu_custom_call.1} parent=5 // pred_check
        _
      $region10: #{tpu_custom_call.1} parent=5 // pred_check_branch
        %204 = sbr.rel (%p201) target = $region12
      $region11: #{tpu_custom_call.1} parent=5 // pred_region
        %s205 = ssub.s32 %s13, 1
        // Predicated region
        $region13: #{tpu_custom_call.1} parent=11 // pred_check
          %p206 = pneg %p60
        $region14: #{tpu_custom_call.1} parent=11 // pred_check_branch
          %208 = sbr.rel (%p206) target = $region16
        $region15: #{tpu_custom_call.1} parent=11 // pred_region
          _
        $region16: #{tpu_custom_call.1} parent=11 // pred_fallthru
          _
        // Predicated region
        $region17: #{tpu_custom_call.1} parent=11 // pred_check
          %p209 = pneg %p81
        $region18: #{tpu_custom_call.1} parent=11 // pred_check_branch
          %211 = sbr.rel (%p209) target = $region20
        $region19: #{tpu_custom_call.1} parent=11 // pred_region
          _
        $region20: #{tpu_custom_call.1} parent=11 // pred_fallthru
          _
        // Predicated region
        $region21: #{tpu_custom_call.1} parent=11 // pred_check
          %p212 = pneg %p102
        $region22: #{tpu_custom_call.1} parent=11 // pred_check_branch
          %214 = sbr.rel (%p212) target = $region24
        $region23: #{tpu_custom_call.1} parent=11 // pred_region
          _
        $region24: #{tpu_custom_call.1} parent=11 // pred_fallthru
          _
        // Predicated region
        $region25: #{tpu_custom_call.1} parent=11 // pred_check
          %p215 = pneg %p123
        $region26: #{tpu_custom_call.1} parent=11 // pred_check_branch
          %217 = sbr.rel (%p215) target = $region28
        $region27: #{tpu_custom_call.1} parent=11 // pred_region
          _
        $region28: #{tpu_custom_call.1} parent=11 // pred_fallthru
          _
        // Predicated region
        $region29: #{tpu_custom_call.1} parent=11 // pred_check
          %p218 = pneg %p144
        $region30: #{tpu_custom_call.1} parent=11 // pred_check_branch
          %220 = sbr.rel (%p218) target = $region32
        $region31: #{tpu_custom_call.1} parent=11 // pred_region
          _
        $region32: #{tpu_custom_call.1} parent=11 // pred_fallthru
          _
        // Predicated region
        $region33: #{tpu_custom_call.1} parent=11 // pred_check
          %p221 = pneg %p165
        $region34: #{tpu_custom_call.1} parent=11 // pred_check_branch
          %223 = sbr.rel (%p221) target = $region36
        $region35: #{tpu_custom_call.1} parent=11 // pred_region
          _
        $region36: #{tpu_custom_call.1} parent=11 // pred_fallthru
          _
      $region12: #{tpu_custom_call.1} parent=5 // pred_fallthru
        _
      %p224 = scmp.lt.s32.totalorder %s13, 2
      // Predicated region
      $region37: #{tpu_custom_call.1} parent=5 // pred_check
        %p225 = pneg %p224
      $region38: #{tpu_custom_call.1} parent=5 // pred_check_branch
        %227 = sbr.rel (%p225) target = $region40
      $region39: #{tpu_custom_call.1} parent=5 // pred_region
        // Predicated region
        $region41: #{tpu_custom_call.1} parent=39 // pred_check
          %p228 = pneg %p33
        $region42: #{tpu_custom_call.1} parent=39 // pred_check_branch
          %230 = sbr.rel (%p228) target = $region44
        $region43: #{tpu_custom_call.1} parent=39 // pred_region
          %s231 = smul.u32 32, %s13
          %s232 = ssub.s32 63, %s231
          %p233 = scmp.lt.s32.totalorder %s232, 32
          %s234 = scalar_select %p233, %s232, 32
          %s235 = smul.u32 64, %s234
          %p236 = scmp.lt.s32.totalorder %s231, 62
          %s237 = scalar_select %p236, %s231, 62
          %s238 = smul.addr %s237, 4
          %s239 = scalar_lea.vmem %s0, %s238
          %s240 = smul.u32 32, %s13
          %s241 = ssub.s32 63, %s240
          %p242 = scmp.lt.s32.totalorder %s241, 32
          %s243 = scalar_select %p242, %s241, 32
          %s244 = smul.u32 64, %s243
        $region44: #{tpu_custom_call.1} parent=39 // pred_fallthru
          _
      $region40: #{tpu_custom_call.1} parent=5 // pred_fallthru
        _
      %p245 = scmp.le.s32.totalorder 1, %s13
      %p246 = scmp.lt.s32.totalorder %s13, 3
      %p247 = pnand %p245, %p246
      %p248 = pneg %p247
      // Predicated region
      $region45: #{tpu_custom_call.1} parent=5 // pred_check
        _
      $region46: #{tpu_custom_call.1} parent=5 // pred_check_branch
        %250 = sbr.rel (%p247) target = $region48
      $region47: #{tpu_custom_call.1} parent=5 // pred_region
        %s251 = ssub.s32 %s13, 1
        %s252 = smul.u32 32, %s18
        %s253 = ssub.s32 63, %s252
        %p254 = scmp.lt.s32.totalorder %s253, 32
        %s255 = scalar_select %p254, %s253, 32
        %s256 = smul.u32 64, %s255
        %p257 = scmp.lt.s32.totalorder %s252, 62
        %s258 = scalar_select %p257, %s252, 62
        %s259 = smul.addr %s258, 4
        %s260 = scalar_lea.vmem %s0, %s259
        %p261 = pneg %p39
        %p262 = pneg %p36
        %p263 = pneg %p60
        %p264 = pneg %p57
        %p265 = pneg %p81
        %p266 = pneg %p78
        %p267 = pneg %p102
        %p268 = pneg %p99
        %p269 = pneg %p123
        %p270 = pneg %p120
        %p271 = pneg %p144
        %p272 = pneg %p141
        %p273 = pneg %p165
        %p274 = pneg %p162
        %p275 = pneg %p191
        %p276 = pneg %p188
        %s277 = sand.u32 %s178, 1
        %s278 = sand.u32 %s178, 1
        %s279 = smul.addr %s278, 256
        %s280 = scalar_lea.vmem [#allocation2], %s279
        %s281 = smul.u32 32, %s18
        %s282 = ssub.s32 63, %s281
        %p283 = scmp.lt.s32.totalorder %s282, 32
        %s284 = scalar_select %p283, %s282, 32
        %s285 = smul.u32 64, %s284
        %p286 = scmp.lt.s32.totalorder %s281, 62
        %s287 = scalar_select %p286, %s281, 62
        %s288 = smul.addr %s287, 4
        %s289 = scalar_lea.vmem %s0, %s288
        %s290 = smul.u32 32, %s18
        %s291 = ssub.s32 63, %s290
        %p292 = scmp.lt.s32.totalorder %s291, 32
        %s293 = scalar_select %p292, %s291, 32
        %s294 = smul.u32 64, %s293
        %s295 = smul.u32 32, %s18
        %s296 = ssub.s32 63, %s295
        %p297 = scmp.lt.s32.totalorder %s296, 32
        %s298 = scalar_select %p297, %s296, 32
        %s299 = smul.u32 128, %s298
        %v301 = vld [vmem:[%s289] sm:$0xf]
        %v302 = vld [vmem:[%s289 + $0x4] sm:$0xf]
        %v303 = vld [vmem:[%s289 + $0x8] sm:$0xf]
        %v304 = vld [vmem:[%s289 + $0xc] sm:$0xf]
        %v305 = vld [vmem:[%s289 + $0x10] sm:$0xf]
        %v306 = vld [vmem:[%s289 + $0x14] sm:$0xf]
        %v307 = vld [vmem:[%s289 + $0x18] sm:$0xf]
        %v308 = vld [vmem:[%s289 + $0x1c] sm:$0xf]
        %v309 = vld [vmem:[%s289 + $0x20] sm:$0xf]
        %v310 = vld [vmem:[%s289 + $0x24] sm:$0xf]
        %v311 = vld [vmem:[%s289 + $0x28] sm:$0xf]
        %v312 = vld [vmem:[%s289 + $0x2c] sm:$0xf]
        %v313 = vld [vmem:[%s289 + $0x30] sm:$0xf]
        %v314 = vld [vmem:[%s289 + $0x34] sm:$0xf]
        %v315 = vld [vmem:[%s289 + $0x38] sm:$0xf]
        %v316 = vld [vmem:[%s289 + $0x3c] sm:$0xf]
        %v317 = vld [vmem:[%s289 + $0x40] sm:$0xf]
        %v318 = vld [vmem:[%s289 + $0x44] sm:$0xf]
        %v319 = vld [vmem:[%s289 + $0x48] sm:$0xf]
        %v320 = vld [vmem:[%s289 + $0x4c] sm:$0xf]
        %v321 = vld [vmem:[%s289 + $0x50] sm:$0xf]
        %v322 = vld [vmem:[%s289 + $0x54] sm:$0xf]
        %v323 = vld [vmem:[%s289 + $0x58] sm:$0xf]
        %v324 = vld [vmem:[%s289 + $0x5c] sm:$0xf]
        %v325 = vld [vmem:[%s289 + $0x60] sm:$0xf]
        %v326 = vld [vmem:[%s289 + $0x64] sm:$0xf]
        %v327 = vld [vmem:[%s289 + $0x68] sm:$0xf]
        %v328 = vld [vmem:[%s289 + $0x6c] sm:$0xf]
        %v329 = vld [vmem:[%s289 + $0x70] sm:$0xf]
        %v330 = vld [vmem:[%s289 + $0x74] sm:$0xf]
        %v331 = vld [vmem:[%s289 + $0x78] sm:$0xf]
        %v332 = vld [vmem:[%s289 + $0x7c] sm:$0xf]
        %v333 = vld [vmem:[%s1] sm:$0xf]
        %v334 = vld [vmem:[%s1 + $0x4] sm:$0xf]
        %v335 = vld [vmem:[%s1 + $0x8] sm:$0xf]
        %v336 = vld [vmem:[%s1 + $0xc] sm:$0xf]
        %v337 = vld [vmem:[%s1 + $0x10] sm:$0xf]
        %v338 = vld [vmem:[%s1 + $0x14] sm:$0x1]
        %v339 = vld [vmem:[%s2] sm:$0x1]
        %v341 = vlaneseq
        %v342 = vshrl.u32 %v341, 7
        %v343 = vsub.s32 0, %v342
        %v344 = vrot.slane %v339, %v343
        %v378 = vunpack.c.l.b16 %v301
        %v379 = vunpack.c.l.b16 %v302
        %v380 = vunpack.c.l.b16 %v303
        %v381 = vunpack.c.l.b16 %v304
        %v382 = vunpack.c.l.b16 %v305
        %v383 = vunpack.c.l.b16 %v306
        %v384 = vunpack.c.l.b16 %v307
        %v385 = vunpack.c.l.b16 %v308
        %v386 = vunpack.c.l.b16 %v309
        %v387 = vunpack.c.l.b16 %v310
        %v388 = vunpack.c.l.b16 %v311
        %v389 = vunpack.c.l.b16 %v312
        %v390 = vunpack.c.l.b16 %v313
        %v391 = vunpack.c.l.b16 %v314
        %v392 = vunpack.c.l.b16 %v315
        %v393 = vunpack.c.l.b16 %v316
        %v394 = vunpack.c.l.b16 %v317
        %v395 = vunpack.c.l.b16 %v318
        %v396 = vunpack.c.l.b16 %v319
        %v397 = vunpack.c.l.b16 %v320
        %v398 = vunpack.c.l.b16 %v321
        %v399 = vunpack.c.l.b16 %v322
        %v400 = vunpack.c.l.b16 %v323
        %v401 = vunpack.c.l.b16 %v324
        %v402 = vunpack.c.l.b16 %v325
        %v403 = vunpack.c.l.b16 %v326
        %v404 = vunpack.c.l.b16 %v327
        %v405 = vunpack.c.l.b16 %v328
        %v406 = vunpack.c.l.b16 %v329
        %v407 = vunpack.c.l.b16 %v330
        %v408 = vunpack.c.l.b16 %v331
        %v409 = vunpack.c.l.b16 %v332
        %v410 = vpack.c.b16 %v379, %v378
        %v411 = vpack.c.b16 %v381, %v380
        %v412 = vpack.c.b16 %v383, %v382
        %v413 = vpack.c.b16 %v385, %v384
        %v414 = vpack.c.b16 %v387, %v386
        %v415 = vpack.c.b16 %v389, %v388
        %v416 = vpack.c.b16 %v391, %v390
        %v417 = vpack.c.b16 %v393, %v392
        %v418 = vpack.c.b16 %v395, %v394
        %v419 = vpack.c.b16 %v397, %v396
        %v420 = vpack.c.b16 %v399, %v398
        %v421 = vpack.c.b16 %v401, %v400
        %v422 = vpack.c.b16 %v403, %v402
        %v423 = vpack.c.b16 %v405, %v404
        %v424 = vpack.c.b16 %v407, %v406
        %v425 = vpack.c.b16 %v409, %v408
        %v432 = vunpack.c.l.b16 %v333
        %v433 = vunpack.c.l.b16 %v334
        %v434 = vunpack.c.l.b16 %v335
        %v435 = vunpack.c.l.b16 %v336
        %v436 = vunpack.c.l.b16 %v337
        %v437 = vunpack.c.l.b16 %v338
        %v438 = vpack.c.b16 %v433, %v432
        %v439 = vpack.c.b16 %v435, %v434
        %v440 = vpack.c.b16 %v437, %v436
        %vm443 = vcmask 334848
        %v445 = vsel %vm443, %v410, 0
        %v448 = vsel %vm443, %v411, 0
        %v451 = vsel %vm443, %v412, 0
        %v454 = vsel %vm443, %v413, 0
        %v457 = vsel %vm443, %v414, 0
        %v460 = vsel %vm443, %v415, 0
        %v463 = vsel %vm443, %v416, 0
        %v466 = vsel %vm443, %v417, 0
        %v469 = vsel %vm443, %v418, 0
        %v472 = vsel %vm443, %v419, 0
        %v475 = vsel %vm443, %v420, 0
        %v478 = vsel %vm443, %v421, 0
        %v481 = vsel %vm443, %v422, 0
        %v484 = vsel %vm443, %v423, 0
        %v487 = vsel %vm443, %v424, 0
        %v490 = vsel %vm443, %v425, 0
        %vm492 = vcmask 1043456
        %vm493 = vcmask 1044480
        %v494 = vsel %vm492, 4294967295, 65535
        %v495 = vsel %vm493, %v494, 0
        %v497 = vand.u32 %v440, %v495
        %499 = vmatprep.subr.bf16.mxu0 0
        %500 = vmatpush1.bf16.msra.mxu0 0
        %501 = vmatprep.subr.bf16.mxu0 0
        %502 = vmatpush1.bf16.msra.mxu0 0
        %503 = vmatprep.subr.bf16.mxu0 0
        %504 = vmatpush1.bf16.msra.mxu0 0
        %505 = vmatprep.subr.bf16.mxu0 0
        %506 = vmatpush1.bf16.msra.mxu0 0
        %507 = vmatprep.subr.bf16.mxu0 0
        %508 = vmatpush1.bf16.msra.mxu0 0
        %509 = vmatprep.subr.bf16.mxu0 0
        %510 = vmatpush1.bf16.msra.mxu0 %v497
        %511 = vmatprep.subr.bf16.mxu0 0
        %512 = vmatpush1.bf16.msra.mxu0 %v439
        %513 = vmatprep.subr.bf16.mxu0 0
        %514 = vmatpush1.bf16.msra.mxu0 %v438
        %515 = vmatprep.subr.bf16.mxu0 0
        %516 = vmatpush2.bf16.msra.mxu0 0
        %517 = vmatprep.subr.bf16.mxu0 0
        %518 = vmatpush2.bf16.msra.mxu0 0
        %519 = vmatprep.subr.bf16.mxu0 0
        %520 = vmatpush2.bf16.msra.mxu0 0
        %521 = vmatprep.subr.bf16.mxu0 0
        %522 = vmatpush2.bf16.msra.mxu0 0
        %523 = vmatprep.subr.bf16.mxu0 0
        %524 = vmatpush2.bf16.msra.mxu0 0
        %525 = vmatprep.subr.bf16.mxu0 0
        %526 = vmatpush2.bf16.msra.mxu0 0
        %527 = vmatprep.subr.bf16.mxu0 0
        %528 = vmatpush2.bf16.msra.mxu0 0
        %529 = vmatprep.subr.bf16.mxu0 0
        %530 = vmatpush2.bf16.msra.mxu0 0
        %531 = vmatprep.mubr.bf16.mxu0 0
        %532 = vmatmul.mubr.bf16.gmra.mxu0 %v445
        %v533 = vpop.f32.mrf.mxu0
        %v534 = vadd.f32 %v344, %v533
        %v535 = vpop.f32.mrf.mxu0
        %v536 = vpop.f32.mrf.mxu0
        %v537 = vadd.f32 %v344, %v536
        %v538 = vpop.f32.mrf.mxu0
        %539 = vmatprep.mubr.bf16.mxu0 0
        %540 = vmatmul.mubr.bf16.gmra.mxu0 %v448
        %v541 = vpop.f32.mrf.mxu0
        %v542 = vadd.f32 %v344, %v541
        %v543 = vpop.f32.mrf.mxu0
        %v544 = vpop.f32.mrf.mxu0
        %v545 = vadd.f32 %v344, %v544
        %v546 = vpop.f32.mrf.mxu0
        %547 = vmatprep.mubr.bf16.mxu0 0
        %548 = vmatmul.mubr.bf16.gmra.mxu0 %v451
        %v549 = vpop.f32.mrf.mxu0
        %v550 = vadd.f32 %v344, %v549
        %v551 = vpop.f32.mrf.mxu0
        %v552 = vpop.f32.mrf.mxu0
        %v553 = vadd.f32 %v344, %v552
        %v554 = vpop.f32.mrf.mxu0
        %555 = vmatprep.mubr.bf16.mxu0 0
        %556 = vmatmul.mubr.bf16.gmra.mxu0 %v454
        %v557 = vpop.f32.mrf.mxu0
        %v558 = vadd.f32 %v344, %v557
        %v559 = vpop.f32.mrf.mxu0
        %v560 = vpop.f32.mrf.mxu0
        %v561 = vadd.f32 %v344, %v560
        %v562 = vpop.f32.mrf.mxu0
        %563 = vmatprep.mubr.bf16.mxu0 0
        %564 = vmatmul.mubr.bf16.gmra.mxu0 %v457
        %v565 = vpop.f32.mrf.mxu0
        %v566 = vadd.f32 %v344, %v565
        %v567 = vpop.f32.mrf.mxu0
        %v568 = vpop.f32.mrf.mxu0
        %v569 = vadd.f32 %v344, %v568
        %v570 = vpop.f32.mrf.mxu0
        %571 = vmatprep.mubr.bf16.mxu0 0
        %572 = vmatmul.mubr.bf16.gmra.mxu0 %v460
        %v573 = vpop.f32.mrf.mxu0
        %v574 = vadd.f32 %v344, %v573
        %v575 = vpop.f32.mrf.mxu0
        %v576 = vpop.f32.mrf.mxu0
        %v577 = vadd.f32 %v344, %v576
        %v578 = vpop.f32.mrf.mxu0
        %579 = vmatprep.mubr.bf16.mxu0 0
        %580 = vmatmul.mubr.bf16.gmra.mxu0 %v463
        %v581 = vpop.f32.mrf.mxu0
        %v582 = vadd.f32 %v344, %v581
        %v583 = vpop.f32.mrf.mxu0
        %v584 = vpop.f32.mrf.mxu0
        %v585 = vadd.f32 %v344, %v584
        %v586 = vpop.f32.mrf.mxu0
        %587 = vmatprep.mubr.bf16.mxu0 0
        %588 = vmatmul.mubr.bf16.gmra.mxu0 %v466
        %v589 = vpop.f32.mrf.mxu0
        %v590 = vadd.f32 %v344, %v589
        %v591 = vpop.f32.mrf.mxu0
        %v592 = vpop.f32.mrf.mxu0
        %v593 = vadd.f32 %v344, %v592
        %v594 = vpop.f32.mrf.mxu0
        %595 = vmatprep.mubr.bf16.mxu0 0
        %596 = vmatmul.mubr.bf16.gmra.mxu0 %v469
        %v597 = vpop.f32.mrf.mxu0
        %v598 = vadd.f32 %v344, %v597
        %v599 = vpop.f32.mrf.mxu0
        %v600 = vpop.f32.mrf.mxu0
        %v601 = vadd.f32 %v344, %v600
        %v602 = vpop.f32.mrf.mxu0
        %603 = vmatprep.mubr.bf16.mxu0 0
        %604 = vmatmul.mubr.bf16.gmra.mxu0 %v472
        %v605 = vpop.f32.mrf.mxu0
        %v606 = vadd.f32 %v344, %v605
        %v607 = vpop.f32.mrf.mxu0
        %v608 = vpop.f32.mrf.mxu0
        %v609 = vadd.f32 %v344, %v608
        %v610 = vpop.f32.mrf.mxu0
        %611 = vmatprep.mubr.bf16.mxu0 0
        %612 = vmatmul.mubr.bf16.gmra.mxu0 %v475
        %v613 = vpop.f32.mrf.mxu0
        %v614 = vadd.f32 %v344, %v613
        %v615 = vpop.f32.mrf.mxu0
        %v616 = vpop.f32.mrf.mxu0
        %v617 = vadd.f32 %v344, %v616
        %v618 = vpop.f32.mrf.mxu0
        %619 = vmatprep.mubr.bf16.mxu0 0
        %620 = vmatmul.mubr.bf16.gmra.mxu0 %v478
        %v621 = vpop.f32.mrf.mxu0
        %v622 = vadd.f32 %v344, %v621
        %v623 = vpop.f32.mrf.mxu0
        %v624 = vpop.f32.mrf.mxu0
        %v625 = vadd.f32 %v344, %v624
        %v626 = vpop.f32.mrf.mxu0
        %627 = vmatprep.mubr.bf16.mxu0 0
        %628 = vmatmul.mubr.bf16.gmra.mxu0 %v481
        %v629 = vpop.f32.mrf.mxu0
        %v630 = vadd.f32 %v344, %v629
        %v631 = vpop.f32.mrf.mxu0
        %v632 = vpop.f32.mrf.mxu0
        %v633 = vadd.f32 %v344, %v632
        %v634 = vpop.f32.mrf.mxu0
        %635 = vmatprep.mubr.bf16.mxu0 0
        %636 = vmatmul.mubr.bf16.gmra.mxu0 %v484
        %v637 = vpop.f32.mrf.mxu0
        %v638 = vadd.f32 %v344, %v637
        %v639 = vpop.f32.mrf.mxu0
        %v640 = vpop.f32.mrf.mxu0
        %v641 = vadd.f32 %v344, %v640
        %v642 = vpop.f32.mrf.mxu0
        %643 = vmatprep.mubr.bf16.mxu0 0
        %644 = vmatmul.mubr.bf16.gmra.mxu0 %v487
        %v645 = vpop.f32.mrf.mxu0
        %v646 = vadd.f32 %v344, %v645
        %v647 = vpop.f32.mrf.mxu0
        %v648 = vpop.f32.mrf.mxu0
        %v649 = vadd.f32 %v344, %v648
        %v650 = vpop.f32.mrf.mxu0
        %651 = vmatprep.mubr.bf16.mxu0 0
        %652 = vmatmul.mubr.bf16.gmra.mxu0 %v490
        %v653 = vpop.f32.mrf.mxu0
        %v654 = vadd.f32 %v344, %v653
        %v655 = vpop.f32.mrf.mxu0
        %v656 = vpop.f32.mrf.mxu0
        %v657 = vadd.f32 %v344, %v656
        %v658 = vpop.f32.mrf.mxu0
        %659 = vdwg.mxu0
        %v660 = vmax.f32 %v534, 0.0
        %v661 = vmax.f32 %v537, 0.0
        %v662 = vmax.f32 %v542, 0.0
        %v663 = vmax.f32 %v545, 0.0
        %v664 = vmax.f32 %v550, 0.0
        %v665 = vmax.f32 %v553, 0.0
        %v666 = vmax.f32 %v558, 0.0
        %v667 = vmax.f32 %v561, 0.0
        %v668 = vmax.f32 %v566, 0.0
        %v669 = vmax.f32 %v569, 0.0
        %v670 = vmax.f32 %v574, 0.0
        %v671 = vmax.f32 %v577, 0.0
        %v672 = vmax.f32 %v582, 0.0
        %v673 = vmax.f32 %v585, 0.0
        %v674 = vmax.f32 %v590, 0.0
        %v675 = vmax.f32 %v593, 0.0
        %v676 = vmax.f32 %v598, 0.0
        %v677 = vmax.f32 %v601, 0.0
        %v678 = vmax.f32 %v606, 0.0
        %v679 = vmax.f32 %v609, 0.0
        %v680 = vmax.f32 %v614, 0.0
        %v681 = vmax.f32 %v617, 0.0
        %v682 = vmax.f32 %v622, 0.0
        %v683 = vmax.f32 %v625, 0.0
        %v684 = vmax.f32 %v630, 0.0
        %v685 = vmax.f32 %v633, 0.0
        %v686 = vmax.f32 %v638, 0.0
        %v687 = vmax.f32 %v641, 0.0
        %v688 = vmax.f32 %v646, 0.0
        %v689 = vmax.f32 %v649, 0.0
        %v690 = vmax.f32 %v654, 0.0
        %v691 = vmax.f32 %v657, 0.0
        %v692 = vld [vmem:[%s3] sm:$0xf]
        %v693 = vld [vmem:[%s3 + $0x4] sm:$0xf]
        %v694 = vld [vmem:[%s3 + $0x8] sm:$0xf]
        %v695 = vld [vmem:[%s3 + $0xc] sm:$0xf]
        %v696 = vld [vmem:[%s3 + $0x10] sm:$0xf]
        %v697 = vld [vmem:[%s3 + $0x14] sm:$0xf]
        %v698 = vld [vmem:[%s3 + $0x18] sm:$0xf]
        %v699 = vld [vmem:[%s3 + $0x1c] sm:$0xf]
        %v700 = vld [vmem:[%s3 + $0x20] sm:$0xf]
        %v701 = vld [vmem:[%s3 + $0x24] sm:$0xf]
        %v702 = vld [vmem:[%s3 + $0x28] sm:$0xf]
        %v703 = vld [vmem:[%s3 + $0x2c] sm:$0xf]
        %v704 = vld [vmem:[%s3 + $0x30] sm:$0xf]
        %v705 = vld [vmem:[%s3 + $0x34] sm:$0xf]
        %v706 = vld [vmem:[%s3 + $0x38] sm:$0xf]
        %v707 = vld [vmem:[%s3 + $0x3c] sm:$0xf]
        %v708 = vld [vmem:[%s4] sm:$0x1]
        %v709 = vpack.c.bf16 %v661, %v660
        %v710 = vpack.c.bf16 %v663, %v662
        %v711 = vpack.c.bf16 %v665, %v664
        %v712 = vpack.c.bf16 %v667, %v666
        %v713 = vpack.c.bf16 %v669, %v668
        %v714 = vpack.c.bf16 %v671, %v670
        %v715 = vpack.c.bf16 %v673, %v672
        %v716 = vpack.c.bf16 %v675, %v674
        %v717 = vpack.c.bf16 %v677, %v676
        %v718 = vpack.c.bf16 %v679, %v678
        %v719 = vpack.c.bf16 %v681, %v680
        %v720 = vpack.c.bf16 %v683, %v682
        %v721 = vpack.c.bf16 %v685, %v684
        %v722 = vpack.c.bf16 %v687, %v686
        %v723 = vpack.c.bf16 %v689, %v688
        %v724 = vpack.c.bf16 %v691, %v690
        %v726 = vlaneseq
        %v727 = vshrl.u32 %v726, 7
        %v728 = vsub.s32 0, %v727
        %v729 = vrot.slane %v708, %v728
        %v747 = vunpack.c.l.b16 %v692
        %v748 = vunpack.c.l.b16 %v693
        %v749 = vunpack.c.l.b16 %v694
        %v750 = vunpack.c.l.b16 %v695
        %v751 = vunpack.c.l.b16 %v696
        %v752 = vunpack.c.l.b16 %v697
        %v753 = vunpack.c.l.b16 %v698
        %v754 = vunpack.c.l.b16 %v699
        %v755 = vunpack.c.l.b16 %v700
        %v756 = vunpack.c.l.b16 %v701
        %v757 = vunpack.c.l.b16 %v702
        %v758 = vunpack.c.l.b16 %v703
        %v759 = vunpack.c.l.b16 %v704
        %v760 = vunpack.c.l.b16 %v705
        %v761 = vunpack.c.l.b16 %v706
        %v762 = vunpack.c.l.b16 %v707
        %v763 = vpack.c.b16 %v748, %v747
        %v764 = vpack.c.b16 %v750, %v749
        %v765 = vpack.c.b16 %v752, %v751
        %v766 = vpack.c.b16 %v754, %v753
        %v767 = vpack.c.b16 %v756, %v755
        %v768 = vpack.c.b16 %v758, %v757
        %v769 = vpack.c.b16 %v760, %v759
        %v770 = vpack.c.b16 %v762, %v761
        %779 = vmatprep.subr.bf16.mxu0 0
        %780 = vmatpush1.bf16.msra.mxu0 %v770
        %781 = vmatprep.subr.bf16.mxu0 0
        %782 = vmatpush1.bf16.msra.mxu0 %v769
        %783 = vmatprep.subr.bf16.mxu0 0
        %784 = vmatpush1.bf16.msra.mxu0 %v768
        %785 = vmatprep.subr.bf16.mxu0 0
        %786 = vmatpush1.bf16.msra.mxu0 %v767
        %787 = vmatprep.subr.bf16.mxu0 0
        %788 = vmatpush1.bf16.msra.mxu0 %v766
        %789 = vmatprep.subr.bf16.mxu0 0
        %790 = vmatpush1.bf16.msra.mxu0 %v765
        %791 = vmatprep.subr.bf16.mxu0 0
        %792 = vmatpush1.bf16.msra.mxu0 %v764
        %793 = vmatprep.subr.bf16.mxu0 0
        %794 = vmatpush1.bf16.msra.mxu0 %v763
        %795 = vmatprep.subr.bf16.mxu0 0
        %796 = vmatpush2.bf16.msra.mxu0 0
        %797 = vmatprep.subr.bf16.mxu0 0
        %798 = vmatpush2.bf16.msra.mxu0 0
        %799 = vmatprep.subr.bf16.mxu0 0
        %800 = vmatpush2.bf16.msra.mxu0 0
        %801 = vmatprep.subr.bf16.mxu0 0
        %802 = vmatpush2.bf16.msra.mxu0 0
        %803 = vmatprep.subr.bf16.mxu0 0
        %804 = vmatpush2.bf16.msra.mxu0 0
        %805 = vmatprep.subr.bf16.mxu0 0
        %806 = vmatpush2.bf16.msra.mxu0 0
        %807 = vmatprep.subr.bf16.mxu0 0
        %808 = vmatpush2.bf16.msra.mxu0 0
        %809 = vmatprep.subr.bf16.mxu0 0
        %810 = vmatpush2.bf16.msra.mxu0 0
        %811 = vmatprep.mubr.bf16.mxu0 0
        %812 = vmatmul.mubr.bf16.gmra.mxu0 %v709
        %v813 = vpop.f32.mrf.mxu0
        %v814 = vadd.f32 %v729, %v813
        %v815 = vpop.f32.mrf.mxu0
        %v816 = vpop.f32.mrf.mxu0
        %v817 = vadd.f32 %v729, %v816
        %v818 = vpop.f32.mrf.mxu0
        %819 = vmatprep.mubr.bf16.mxu0 0
        %820 = vmatmul.mubr.bf16.gmra.mxu0 %v710
        %v821 = vpop.f32.mrf.mxu0
        %v822 = vadd.f32 %v729, %v821
        %v823 = vpop.f32.mrf.mxu0
        %v824 = vpop.f32.mrf.mxu0
        %v825 = vadd.f32 %v729, %v824
        %v826 = vpop.f32.mrf.mxu0
        %827 = vmatprep.mubr.bf16.mxu0 0
        %828 = vmatmul.mubr.bf16.gmra.mxu0 %v711
        %v829 = vpop.f32.mrf.mxu0
        %v830 = vadd.f32 %v729, %v829
        %v831 = vpop.f32.mrf.mxu0
        %v832 = vpop.f32.mrf.mxu0
        %v833 = vadd.f32 %v729, %v832
        %v834 = vpop.f32.mrf.mxu0
        %835 = vmatprep.mubr.bf16.mxu0 0
        %836 = vmatmul.mubr.bf16.gmra.mxu0 %v712
        %v837 = vpop.f32.mrf.mxu0
        %v838 = vadd.f32 %v729, %v837
        %v839 = vpop.f32.mrf.mxu0
        %v840 = vpop.f32.mrf.mxu0
        %v841 = vadd.f32 %v729, %v840
        %v842 = vpop.f32.mrf.mxu0
        %843 = vmatprep.mubr.bf16.mxu0 0
        %844 = vmatmul.mubr.bf16.gmra.mxu0 %v713
        %v845 = vpop.f32.mrf.mxu0
        %v846 = vadd.f32 %v729, %v845
        %v847 = vpop.f32.mrf.mxu0
        %v848 = vpop.f32.mrf.mxu0
        %v849 = vadd.f32 %v729, %v848
        %v850 = vpop.f32.mrf.mxu0
        %851 = vmatprep.mubr.bf16.mxu0 0
        %852 = vmatmul.mubr.bf16.gmra.mxu0 %v714
        %v853 = vpop.f32.mrf.mxu0
        %v854 = vadd.f32 %v729, %v853
        %v855 = vpop.f32.mrf.mxu0
        %v856 = vpop.f32.mrf.mxu0
        %v857 = vadd.f32 %v729, %v856
        %v858 = vpop.f32.mrf.mxu0
        %859 = vmatprep.mubr.bf16.mxu0 0
        %860 = vmatmul.mubr.bf16.gmra.mxu0 %v715
        %v861 = vpop.f32.mrf.mxu0
        %v862 = vadd.f32 %v729, %v861
        %v863 = vpop.f32.mrf.mxu0
        %v864 = vpop.f32.mrf.mxu0
        %v865 = vadd.f32 %v729, %v864
        %v866 = vpop.f32.mrf.mxu0
        %867 = vmatprep.mubr.bf16.mxu0 0
        %868 = vmatmul.mubr.bf16.gmra.mxu0 %v716
        %v869 = vpop.f32.mrf.mxu0
        %v870 = vadd.f32 %v729, %v869
        %v871 = vpop.f32.mrf.mxu0
        %v872 = vpop.f32.mrf.mxu0
        %v873 = vadd.f32 %v729, %v872
        %v874 = vpop.f32.mrf.mxu0
        %875 = vmatprep.mubr.bf16.mxu0 0
        %876 = vmatmul.mubr.bf16.gmra.mxu0 %v717
        %v877 = vpop.f32.mrf.mxu0
        %v878 = vadd.f32 %v729, %v877
        %v879 = vpop.f32.mrf.mxu0
        %v880 = vpop.f32.mrf.mxu0
        %v881 = vadd.f32 %v729, %v880
        %v882 = vpop.f32.mrf.mxu0
        %883 = vmatprep.mubr.bf16.mxu0 0
        %884 = vmatmul.mubr.bf16.gmra.mxu0 %v718
        %v885 = vpop.f32.mrf.mxu0
        %v886 = vadd.f32 %v729, %v885
        %v887 = vpop.f32.mrf.mxu0
        %v888 = vpop.f32.mrf.mxu0
        %v889 = vadd.f32 %v729, %v888
        %v890 = vpop.f32.mrf.mxu0
        %891 = vmatprep.mubr.bf16.mxu0 0
        %892 = vmatmul.mubr.bf16.gmra.mxu0 %v719
        %v893 = vpop.f32.mrf.mxu0
        %v894 = vadd.f32 %v729, %v893
        %v895 = vpop.f32.mrf.mxu0
        %v896 = vpop.f32.mrf.mxu0
        %v897 = vadd.f32 %v729, %v896
        %v898 = vpop.f32.mrf.mxu0
        %899 = vmatprep.mubr.bf16.mxu0 0
        %900 = vmatmul.mubr.bf16.gmra.mxu0 %v720
        %v901 = vpop.f32.mrf.mxu0
        %v902 = vadd.f32 %v729, %v901
        %v903 = vpop.f32.mrf.mxu0
        %v904 = vpop.f32.mrf.mxu0
        %v905 = vadd.f32 %v729, %v904
        %v906 = vpop.f32.mrf.mxu0
        %907 = vmatprep.mubr.bf16.mxu0 0
        %908 = vmatmul.mubr.bf16.gmra.mxu0 %v721
        %v909 = vpop.f32.mrf.mxu0
        %v910 = vadd.f32 %v729, %v909
        %v911 = vpop.f32.mrf.mxu0
        %v912 = vpop.f32.mrf.mxu0
        %v913 = vadd.f32 %v729, %v912
        %v914 = vpop.f32.mrf.mxu0
        %915 = vmatprep.mubr.bf16.mxu0 0
        %916 = vmatmul.mubr.bf16.gmra.mxu0 %v722
        %v917 = vpop.f32.mrf.mxu0
        %v918 = vadd.f32 %v729, %v917
        %v919 = vpop.f32.mrf.mxu0
        %v920 = vpop.f32.mrf.mxu0
        %v921 = vadd.f32 %v729, %v920
        %v922 = vpop.f32.mrf.mxu0
        %923 = vmatprep.mubr.bf16.mxu0 0
        %924 = vmatmul.mubr.bf16.gmra.mxu0 %v723
        %v925 = vpop.f32.mrf.mxu0
        %v926 = vadd.f32 %v729, %v925
        %v927 = vpop.f32.mrf.mxu0
        %v928 = vpop.f32.mrf.mxu0
        %v929 = vadd.f32 %v729, %v928
        %v930 = vpop.f32.mrf.mxu0
        %931 = vmatprep.mubr.bf16.mxu0 0
        %932 = vmatmul.mubr.bf16.gmra.mxu0 %v724
        %v933 = vpop.f32.mrf.mxu0
        %v934 = vadd.f32 %v729, %v933
        %v935 = vpop.f32.mrf.mxu0
        %v936 = vpop.f32.mrf.mxu0
        %v937 = vadd.f32 %v729, %v936
        %v938 = vpop.f32.mrf.mxu0
        %939 = vdwg.mxu0
        %v940 = vmax.f32 %v814, 0.0
        %v941 = vmax.f32 %v817, 0.0
        %v942 = vmax.f32 %v822, 0.0
        %v943 = vmax.f32 %v825, 0.0
        %v944 = vmax.f32 %v830, 0.0
        %v945 = vmax.f32 %v833, 0.0
        %v946 = vmax.f32 %v838, 0.0
        %v947 = vmax.f32 %v841, 0.0
        %v948 = vmax.f32 %v846, 0.0
        %v949 = vmax.f32 %v849, 0.0
        %v950 = vmax.f32 %v854, 0.0
        %v951 = vmax.f32 %v857, 0.0
        %v952 = vmax.f32 %v862, 0.0
        %v953 = vmax.f32 %v865, 0.0
        %v954 = vmax.f32 %v870, 0.0
        %v955 = vmax.f32 %v873, 0.0
        %v956 = vmax.f32 %v878, 0.0
        %v957 = vmax.f32 %v881, 0.0
        %v958 = vmax.f32 %v886, 0.0
        %v959 = vmax.f32 %v889, 0.0
        %v960 = vmax.f32 %v894, 0.0
        %v961 = vmax.f32 %v897, 0.0
        %v962 = vmax.f32 %v902, 0.0
        %v963 = vmax.f32 %v905, 0.0
        %v964 = vmax.f32 %v910, 0.0
        %v965 = vmax.f32 %v913, 0.0
        %v966 = vmax.f32 %v918, 0.0
        %v967 = vmax.f32 %v921, 0.0
        %v968 = vmax.f32 %v926, 0.0
        %v969 = vmax.f32 %v929, 0.0
        %v970 = vmax.f32 %v934, 0.0
        %v971 = vmax.f32 %v937, 0.0
        %v972 = vld [vmem:[%s5] sm:$0xf]
        %v973 = vld [vmem:[%s5 + $0x4] sm:$0xf]
        %v974 = vld [vmem:[%s5 + $0x8] sm:$0xf]
        %v975 = vld [vmem:[%s5 + $0xc] sm:$0xf]
        %v976 = vld [vmem:[%s5 + $0x10] sm:$0xf]
        %v977 = vld [vmem:[%s5 + $0x14] sm:$0xf]
        %v978 = vld [vmem:[%s5 + $0x18] sm:$0xf]
        %v979 = vld [vmem:[%s5 + $0x1c] sm:$0xf]
        %v980 = vld [vmem:[%s5 + $0x20] sm:$0xf]
        %v981 = vld [vmem:[%s5 + $0x24] sm:$0xf]
        %v982 = vld [vmem:[%s5 + $0x28] sm:$0xf]
        %v983 = vld [vmem:[%s5 + $0x2c] sm:$0xf]
        %v984 = vld [vmem:[%s5 + $0x30] sm:$0xf]
        %v985 = vld [vmem:[%s5 + $0x34] sm:$0xf]
        %v986 = vld [vmem:[%s5 + $0x38] sm:$0xf]
        %v987 = vld [vmem:[%s5 + $0x3c] sm:$0xf]
        %v988 = vld [vmem:[%s6] sm:$0x1]
        %v989 = vpack.c.bf16 %v941, %v940
        %v990 = vpack.c.bf16 %v943, %v942
        %v991 = vpack.c.bf16 %v945, %v944
        %v992 = vpack.c.bf16 %v947, %v946
        %v993 = vpack.c.bf16 %v949, %v948
        %v994 = vpack.c.bf16 %v951, %v950
        %v995 = vpack.c.bf16 %v953, %v952
        %v996 = vpack.c.bf16 %v955, %v954
        %v997 = vpack.c.bf16 %v957, %v956
        %v998 = vpack.c.bf16 %v959, %v958
        %v999 = vpack.c.bf16 %v961, %v960
        %v1000 = vpack.c.bf16 %v963, %v962
        %v1001 = vpack.c.bf16 %v965, %v964
        %v1002 = vpack.c.bf16 %v967, %v966
        %v1003 = vpack.c.bf16 %v969, %v968
        %v1004 = vpack.c.bf16 %v971, %v970
        %v1006 = vlaneseq
        %v1007 = vshrl.u32 %v1006, 7
        %v1008 = vsub.s32 0, %v1007
        %v1009 = vrot.slane %v988, %v1008
        %v1027 = vunpack.c.l.b16 %v972
        %v1028 = vunpack.c.l.b16 %v973
        %v1029 = vunpack.c.l.b16 %v974
        %v1030 = vunpack.c.l.b16 %v975
        %v1031 = vunpack.c.l.b16 %v976
        %v1032 = vunpack.c.l.b16 %v977
        %v1033 = vunpack.c.l.b16 %v978
        %v1034 = vunpack.c.l.b16 %v979
        %v1035 = vunpack.c.l.b16 %v980
        %v1036 = vunpack.c.l.b16 %v981
        %v1037 = vunpack.c.l.b16 %v982
        %v1038 = vunpack.c.l.b16 %v983
        %v1039 = vunpack.c.l.b16 %v984
        %v1040 = vunpack.c.l.b16 %v985
        %v1041 = vunpack.c.l.b16 %v986
        %v1042 = vunpack.c.l.b16 %v987
        %v1043 = vpack.c.b16 %v1028, %v1027
        %v1044 = vpack.c.b16 %v1030, %v1029
        %v1045 = vpack.c.b16 %v1032, %v1031
        %v1046 = vpack.c.b16 %v1034, %v1033
        %v1047 = vpack.c.b16 %v1036, %v1035
        %v1048 = vpack.c.b16 %v1038, %v1037
        %v1049 = vpack.c.b16 %v1040, %v1039
        %v1050 = vpack.c.b16 %v1042, %v1041
        %1059 = vmatprep.subr.bf16.mxu0 0
        %1060 = vmatpush1.bf16.msra.mxu0 %v1050
        %1061 = vmatprep.subr.bf16.mxu0 0
        %1062 = vmatpush1.bf16.msra.mxu0 %v1049
        %1063 = vmatprep.subr.bf16.mxu0 0
        %1064 = vmatpush1.bf16.msra.mxu0 %v1048
        %1065 = vmatprep.subr.bf16.mxu0 0
        %1066 = vmatpush1.bf16.msra.mxu0 %v1047
        %1067 = vmatprep.subr.bf16.mxu0 0
        %1068 = vmatpush1.bf16.msra.mxu0 %v1046
        %1069 = vmatprep.subr.bf16.mxu0 0
        %1070 = vmatpush1.bf16.msra.mxu0 %v1045
        %1071 = vmatprep.subr.bf16.mxu0 0
        %1072 = vmatpush1.bf16.msra.mxu0 %v1044
        %1073 = vmatprep.subr.bf16.mxu0 0
        %1074 = vmatpush1.bf16.msra.mxu0 %v1043
        %1075 = vmatprep.subr.bf16.mxu0 0
        %1076 = vmatpush2.bf16.msra.mxu0 0
        %1077 = vmatprep.subr.bf16.mxu0 0
        %1078 = vmatpush2.bf16.msra.mxu0 0
        %1079 = vmatprep.subr.bf16.mxu0 0
        %1080 = vmatpush2.bf16.msra.mxu0 0
        %1081 = vmatprep.subr.bf16.mxu0 0
        %1082 = vmatpush2.bf16.msra.mxu0 0
        %1083 = vmatprep.subr.bf16.mxu0 0
        %1084 = vmatpush2.bf16.msra.mxu0 0
        %1085 = vmatprep.subr.bf16.mxu0 0
        %1086 = vmatpush2.bf16.msra.mxu0 0
        %1087 = vmatprep.subr.bf16.mxu0 0
        %1088 = vmatpush2.bf16.msra.mxu0 0
        %1089 = vmatprep.subr.bf16.mxu0 0
        %1090 = vmatpush2.bf16.msra.mxu0 0
        %1091 = vmatprep.mubr.bf16.mxu0 0
        %1092 = vmatmul.mubr.bf16.gmra.mxu0 %v989
        %v1093 = vpop.f32.mrf.mxu0
        %v1094 = vadd.f32 %v1009, %v1093
        %v1095 = vpop.f32.mrf.mxu0
        %v1096 = vpop.f32.mrf.mxu0
        %v1097 = vadd.f32 %v1009, %v1096
        %v1098 = vpop.f32.mrf.mxu0
        %1099 = vmatprep.mubr.bf16.mxu0 0
        %1100 = vmatmul.mubr.bf16.gmra.mxu0 %v990
        %v1101 = vpop.f32.mrf.mxu0
        %v1102 = vadd.f32 %v1009, %v1101
        %v1103 = vpop.f32.mrf.mxu0
        %v1104 = vpop.f32.mrf.mxu0
        %v1105 = vadd.f32 %v1009, %v1104
        %v1106 = vpop.f32.mrf.mxu0
        %1107 = vmatprep.mubr.bf16.mxu0 0
        %1108 = vmatmul.mubr.bf16.gmra.mxu0 %v991
        %v1109 = vpop.f32.mrf.mxu0
        %v1110 = vadd.f32 %v1009, %v1109
        %v1111 = vpop.f32.mrf.mxu0
        %v1112 = vpop.f32.mrf.mxu0
        %v1113 = vadd.f32 %v1009, %v1112
        %v1114 = vpop.f32.mrf.mxu0
        %1115 = vmatprep.mubr.bf16.mxu0 0
        %1116 = vmatmul.mubr.bf16.gmra.mxu0 %v992
        %v1117 = vpop.f32.mrf.mxu0
        %v1118 = vadd.f32 %v1009, %v1117
        %v1119 = vpop.f32.mrf.mxu0
        %v1120 = vpop.f32.mrf.mxu0
        %v1121 = vadd.f32 %v1009, %v1120
        %v1122 = vpop.f32.mrf.mxu0
        %1123 = vmatprep.mubr.bf16.mxu0 0
        %1124 = vmatmul.mubr.bf16.gmra.mxu0 %v993
        %v1125 = vpop.f32.mrf.mxu0
        %v1126 = vadd.f32 %v1009, %v1125
        %v1127 = vpop.f32.mrf.mxu0
        %v1128 = vpop.f32.mrf.mxu0
        %v1129 = vadd.f32 %v1009, %v1128
        %v1130 = vpop.f32.mrf.mxu0
        %1131 = vmatprep.mubr.bf16.mxu0 0
        %1132 = vmatmul.mubr.bf16.gmra.mxu0 %v994
        %v1133 = vpop.f32.mrf.mxu0
        %v1134 = vadd.f32 %v1009, %v1133
        %v1135 = vpop.f32.mrf.mxu0
        %v1136 = vpop.f32.mrf.mxu0
        %v1137 = vadd.f32 %v1009, %v1136
        %v1138 = vpop.f32.mrf.mxu0
        %1139 = vmatprep.mubr.bf16.mxu0 0
        %1140 = vmatmul.mubr.bf16.gmra.mxu0 %v995
        %v1141 = vpop.f32.mrf.mxu0
        %v1142 = vadd.f32 %v1009, %v1141
        %v1143 = vpop.f32.mrf.mxu0
        %v1144 = vpop.f32.mrf.mxu0
        %v1145 = vadd.f32 %v1009, %v1144
        %v1146 = vpop.f32.mrf.mxu0
        %1147 = vmatprep.mubr.bf16.mxu0 0
        %1148 = vmatmul.mubr.bf16.gmra.mxu0 %v996
        %v1149 = vpop.f32.mrf.mxu0
        %v1150 = vadd.f32 %v1009, %v1149
        %v1151 = vpop.f32.mrf.mxu0
        %v1152 = vpop.f32.mrf.mxu0
        %v1153 = vadd.f32 %v1009, %v1152
        %v1154 = vpop.f32.mrf.mxu0
        %1155 = vmatprep.mubr.bf16.mxu0 0
        %1156 = vmatmul.mubr.bf16.gmra.mxu0 %v997
        %v1157 = vpop.f32.mrf.mxu0
        %v1158 = vadd.f32 %v1009, %v1157
        %v1159 = vpop.f32.mrf.mxu0
        %v1160 = vpop.f32.mrf.mxu0
        %v1161 = vadd.f32 %v1009, %v1160
        %v1162 = vpop.f32.mrf.mxu0
        %1163 = vmatprep.mubr.bf16.mxu0 0
        %1164 = vmatmul.mubr.bf16.gmra.mxu0 %v998
        %v1165 = vpop.f32.mrf.mxu0
        %v1166 = vadd.f32 %v1009, %v1165
        %v1167 = vpop.f32.mrf.mxu0
        %v1168 = vpop.f32.mrf.mxu0
        %v1169 = vadd.f32 %v1009, %v1168
        %v1170 = vpop.f32.mrf.mxu0
        %1171 = vmatprep.mubr.bf16.mxu0 0
        %1172 = vmatmul.mubr.bf16.gmra.mxu0 %v999
        %v1173 = vpop.f32.mrf.mxu0
        %v1174 = vadd.f32 %v1009, %v1173
        %v1175 = vpop.f32.mrf.mxu0
        %v1176 = vpop.f32.mrf.mxu0
        %v1177 = vadd.f32 %v1009, %v1176
        %v1178 = vpop.f32.mrf.mxu0
        %1179 = vmatprep.mubr.bf16.mxu0 0
        %1180 = vmatmul.mubr.bf16.gmra.mxu0 %v1000
        %v1181 = vpop.f32.mrf.mxu0
        %v1182 = vadd.f32 %v1009, %v1181
        %v1183 = vpop.f32.mrf.mxu0
        %v1184 = vpop.f32.mrf.mxu0
        %v1185 = vadd.f32 %v1009, %v1184
        %v1186 = vpop.f32.mrf.mxu0
        %1187 = vmatprep.mubr.bf16.mxu0 0
        %1188 = vmatmul.mubr.bf16.gmra.mxu0 %v1001
        %v1189 = vpop.f32.mrf.mxu0
        %v1190 = vadd.f32 %v1009, %v1189
        %v1191 = vpop.f32.mrf.mxu0
        %v1192 = vpop.f32.mrf.mxu0
        %v1193 = vadd.f32 %v1009, %v1192
        %v1194 = vpop.f32.mrf.mxu0
        %1195 = vmatprep.mubr.bf16.mxu0 0
        %1196 = vmatmul.mubr.bf16.gmra.mxu0 %v1002
        %v1197 = vpop.f32.mrf.mxu0
        %v1198 = vadd.f32 %v1009, %v1197
        %v1199 = vpop.f32.mrf.mxu0
        %v1200 = vpop.f32.mrf.mxu0
        %v1201 = vadd.f32 %v1009, %v1200
        %v1202 = vpop.f32.mrf.mxu0
        %1203 = vmatprep.mubr.bf16.mxu0 0
        %1204 = vmatmul.mubr.bf16.gmra.mxu0 %v1003
        %v1205 = vpop.f32.mrf.mxu0
        %v1206 = vadd.f32 %v1009, %v1205
        %v1207 = vpop.f32.mrf.mxu0
        %v1208 = vpop.f32.mrf.mxu0
        %v1209 = vadd.f32 %v1009, %v1208
        %v1210 = vpop.f32.mrf.mxu0
        %1211 = vmatprep.mubr.bf16.mxu0 0
        %1212 = vmatmul.mubr.bf16.gmra.mxu0 %v1004
        %v1213 = vpop.f32.mrf.mxu0
        %v1214 = vadd.f32 %v1009, %v1213
        %v1215 = vpop.f32.mrf.mxu0
        %v1216 = vpop.f32.mrf.mxu0
        %v1217 = vadd.f32 %v1009, %v1216
        %v1218 = vpop.f32.mrf.mxu0
        %1219 = vdwg.mxu0
        %v1220 = vtanh.pop %v1094
        %v1221 = vtanh.pop %v1097
        %v1222 = vtanh.pop %v1102
        %v1223 = vtanh.pop %v1105
        %v1224 = vtanh.pop %v1110
        %v1225 = vtanh.pop %v1113
        %v1226 = vtanh.pop %v1118
        %v1227 = vtanh.pop %v1121
        %v1228 = vtanh.pop %v1126
        %v1229 = vtanh.pop %v1129
        %v1230 = vtanh.pop %v1134
        %v1231 = vtanh.pop %v1137
        %v1232 = vtanh.pop %v1142
        %v1233 = vtanh.pop %v1145
        %v1234 = vtanh.pop %v1150
        %v1235 = vtanh.pop %v1153
        %v1236 = vtanh.pop %v1158
        %v1237 = vtanh.pop %v1161
        %v1238 = vtanh.pop %v1166
        %v1239 = vtanh.pop %v1169
        %v1240 = vtanh.pop %v1174
        %v1241 = vtanh.pop %v1177
        %v1242 = vtanh.pop %v1182
        %v1243 = vtanh.pop %v1185
        %v1244 = vtanh.pop %v1190
        %v1245 = vtanh.pop %v1193
        %v1246 = vtanh.pop %v1198
        %v1247 = vtanh.pop %v1201
        %v1248 = vtanh.pop %v1206
        %v1249 = vtanh.pop %v1209
        %v1250 = vtanh.pop %v1214
        %v1251 = vtanh.pop %v1217
        %vm1252 = vcmask 23552
        %1253 = vst.msk [vmem:[%s280] sm:$0xff] %vm1252, %v1220
        %1254 = vst.msk [vmem:[%s280 + $0x8] sm:$0xff] %vm1252, %v1221
        %1255 = vst.msk [vmem:[%s280 + $0x10] sm:$0xff] %vm1252, %v1222
        %1256 = vst.msk [vmem:[%s280 + $0x18] sm:$0xff] %vm1252, %v1223
        %1257 = vst.msk [vmem:[%s280 + $0x20] sm:$0xff] %vm1252, %v1224
        %1258 = vst.msk [vmem:[%s280 + $0x28] sm:$0xff] %vm1252, %v1225
        %1259 = vst.msk [vmem:[%s280 + $0x30] sm:$0xff] %vm1252, %v1226
        %1260 = vst.msk [vmem:[%s280 + $0x38] sm:$0xff] %vm1252, %v1227
        %1261 = vst.msk [vmem:[%s280 + $0x40] sm:$0xff] %vm1252, %v1228
        %1262 = vst.msk [vmem:[%s280 + $0x48] sm:$0xff] %vm1252, %v1229
        %1263 = vst.msk [vmem:[%s280 + $0x50] sm:$0xff] %vm1252, %v1230
        %1264 = vst.msk [vmem:[%s280 + $0x58] sm:$0xff] %vm1252, %v1231
        %1265 = vst.msk [vmem:[%s280 + $0x60] sm:$0xff] %vm1252, %v1232
        %1266 = vst.msk [vmem:[%s280 + $0x68] sm:$0xff] %vm1252, %v1233
        %1267 = vst.msk [vmem:[%s280 + $0x70] sm:$0xff] %vm1252, %v1234
        %1268 = vst.msk [vmem:[%s280 + $0x78] sm:$0xff] %vm1252, %v1235
        %1269 = vst.msk [vmem:[%s280 + $0x80] sm:$0xff] %vm1252, %v1236
        %1270 = vst.msk [vmem:[%s280 + $0x88] sm:$0xff] %vm1252, %v1237
        %1271 = vst.msk [vmem:[%s280 + $0x90] sm:$0xff] %vm1252, %v1238
        %1272 = vst.msk [vmem:[%s280 + $0x98] sm:$0xff] %vm1252, %v1239
        %1273 = vst.msk [vmem:[%s280 + $0xa0] sm:$0xff] %vm1252, %v1240
        %1274 = vst.msk [vmem:[%s280 + $0xa8] sm:$0xff] %vm1252, %v1241
        %1275 = vst.msk [vmem:[%s280 + $0xb0] sm:$0xff] %vm1252, %v1242
        %1276 = vst.msk [vmem:[%s280 + $0xb8] sm:$0xff] %vm1252, %v1243
        %1277 = vst.msk [vmem:[%s280 + $0xc0] sm:$0xff] %vm1252, %v1244
        %1278 = vst.msk [vmem:[%s280 + $0xc8] sm:$0xff] %vm1252, %v1245
        %1279 = vst.msk [vmem:[%s280 + $0xd0] sm:$0xff] %vm1252, %v1246
        %1280 = vst.msk [vmem:[%s280 + $0xd8] sm:$0xff] %vm1252, %v1247
        %1281 = vst.msk [vmem:[%s280 + $0xe0] sm:$0xff] %vm1252, %v1248
        %1282 = vst.msk [vmem:[%s280 + $0xe8] sm:$0xff] %vm1252, %v1249
        %1283 = vst.msk [vmem:[%s280 + $0xf0] sm:$0xff] %vm1252, %v1250
        %1284 = vst.msk [vmem:[%s280 + $0xf8] sm:$0xff] %vm1252, %v1251
        %s1285 = sand.u32 %s178, 1
        %s1286 = sand.u32 %s178, 1
        %s1287 = smul.addr %s1286, 256
        %s1288 = scalar_lea.vmem [#allocation2], %s1287
        // Predicated region
        $region49: #{tpu_custom_call.1} parent=47 // pred_check
          %p1289 = pneg %p188
        $region50: #{tpu_custom_call.1} parent=47 // pred_check_branch
          %1291 = sbr.rel (%p1289) target = $region52
        $region51: #{tpu_custom_call.1} parent=47 // pred_region
          %s1292 = smul.u32 32, %s18
          %s1293 = ssub.s32 63, %s1292
          %p1294 = scmp.lt.s32.totalorder %s1293, 32
          %s1295 = scalar_select %p1294, %s1293, 32
          %s1296 = smul.u32 128, %s1295
          %p1297 = scmp.ne.s32.totalorder 0, %s1296
          %s1298 = smul.addr %s1292, 8
          %s1299 = scalar_lea.vmem %s7, %s1298
          // Predicated region
          $region53: #{tpu_custom_call.1} parent=51 // pred_check
            %p1300 = pneg %p1297
          $region54: #{tpu_custom_call.1} parent=51 // pred_check_branch
            %1302 = sbr.rel (%p1300) target = $region56
          $region55: #{tpu_custom_call.1} parent=51 // pred_region
            // Predicated region
            $region57: #{tpu_custom_call.1} parent=55 // pred_check
              _
            $region58: #{tpu_custom_call.1} parent=55 // pred_check_branch
              %1304 = sbr.rel (0) target = $region60
            $region59: #{tpu_custom_call.1} parent=55 // pred_region
              // Predicated region
              $region79: #{tpu_custom_call.1} parent=59 // pred_check
                _
              $region80: #{tpu_custom_call.1} parent=59 // pred_check_branch
                %1416 = sbr.rel (0) target = $region82
              $region81: #{tpu_custom_call.1} parent=59 // pred_region
                %s1417 = sshrl.u32 %s1295, 5
                // While loop
                $region83: #{tpu_custom_call.1} parent=81 // loop_pre_header
                  _
                $region84: #{tpu_custom_call.1} parent=81 // loop_header
                  %s1419 = sphi 0, %s1421
                  %p1420 = scmp.ge.s32.totalorder %s1419, %s1417
                  %s1424 = sphi 0, %s1493
                  %s1425 = sphi %s1288, %s1496
                  %s1426 = sphi %s1299, %s1497
                $region85: #{tpu_custom_call.1} parent=81 // loop_header_branch
                  %1423 = sbr.rel (%p1420) target = $region89
                $region86: #{tpu_custom_call.1} parent=81 // loop_body
                  %v1427 = vld [vmem:[%s1425] sm:$0xff]
                  %1428 = vst [vmem:[%s1426] sm:$0xff] %v1427
                  %v1429 = vld [vmem:[%s1425 + $0x8] sm:$0xff]
                  %1430 = vst [vmem:[%s1426 + $0x8] sm:$0xff] %v1429
                  %v1431 = vld [vmem:[%s1425 + $0x10] sm:$0xff]
                  %1432 = vst [vmem:[%s1426 + $0x10] sm:$0xff] %v1431
                  %v1433 = vld [vmem:[%s1425 + $0x18] sm:$0xff]
                  %1434 = vst [vmem:[%s1426 + $0x18] sm:$0xff] %v1433
                  %v1435 = vld [vmem:[%s1425 + $0x20] sm:$0xff]
                  %1436 = vst [vmem:[%s1426 + $0x20] sm:$0xff] %v1435
                  %v1437 = vld [vmem:[%s1425 + $0x28] sm:$0xff]
                  %1438 = vst [vmem:[%s1426 + $0x28] sm:$0xff] %v1437
                  %v1439 = vld [vmem:[%s1425 + $0x30] sm:$0xff]
                  %1440 = vst [vmem:[%s1426 + $0x30] sm:$0xff] %v1439
                  %v1441 = vld [vmem:[%s1425 + $0x38] sm:$0xff]
                  %1442 = vst [vmem:[%s1426 + $0x38] sm:$0xff] %v1441
                  %v1443 = vld [vmem:[%s1425 + $0x40] sm:$0xff]
                  %1444 = vst [vmem:[%s1426 + $0x40] sm:$0xff] %v1443
                  %v1445 = vld [vmem:[%s1425 + $0x48] sm:$0xff]
                  %1446 = vst [vmem:[%s1426 + $0x48] sm:$0xff] %v1445
                  %v1447 = vld [vmem:[%s1425 + $0x50] sm:$0xff]
                  %1448 = vst [vmem:[%s1426 + $0x50] sm:$0xff] %v1447
                  %v1449 = vld [vmem:[%s1425 + $0x58] sm:$0xff]
                  %1450 = vst [vmem:[%s1426 + $0x58] sm:$0xff] %v1449
                  %v1451 = vld [vmem:[%s1425 + $0x60] sm:$0xff]
                  %1452 = vst [vmem:[%s1426 + $0x60] sm:$0xff] %v1451
                  %v1453 = vld [vmem:[%s1425 + $0x68] sm:$0xff]
                  %1454 = vst [vmem:[%s1426 + $0x68] sm:$0xff] %v1453
                  %v1455 = vld [vmem:[%s1425 + $0x70] sm:$0xff]
                  %1456 = vst [vmem:[%s1426 + $0x70] sm:$0xff] %v1455
                  %v1457 = vld [vmem:[%s1425 + $0x78] sm:$0xff]
                  %1458 = vst [vmem:[%s1426 + $0x78] sm:$0xff] %v1457
                  %v1459 = vld [vmem:[%s1425 + $0x80] sm:$0xff]
                  %1460 = vst [vmem:[%s1426 + $0x80] sm:$0xff] %v1459
                  %v1461 = vld [vmem:[%s1425 + $0x88] sm:$0xff]
                  %1462 = vst [vmem:[%s1426 + $0x88] sm:$0xff] %v1461
                  %v1463 = vld [vmem:[%s1425 + $0x90] sm:$0xff]
                  %1464 = vst [vmem:[%s1426 + $0x90] sm:$0xff] %v1463
                  %v1465 = vld [vmem:[%s1425 + $0x98] sm:$0xff]
                  %1466 = vst [vmem:[%s1426 + $0x98] sm:$0xff] %v1465
                  %v1467 = vld [vmem:[%s1425 + $0xa0] sm:$0xff]
                  %1468 = vst [vmem:[%s1426 + $0xa0] sm:$0xff] %v1467
                  %v1469 = vld [vmem:[%s1425 + $0xa8] sm:$0xff]
                  %1470 = vst [vmem:[%s1426 + $0xa8] sm:$0xff] %v1469
                  %v1471 = vld [vmem:[%s1425 + $0xb0] sm:$0xff]
                  %1472 = vst [vmem:[%s1426 + $0xb0] sm:$0xff] %v1471
                  %v1473 = vld [vmem:[%s1425 + $0xb8] sm:$0xff]
                  %1474 = vst [vmem:[%s1426 + $0xb8] sm:$0xff] %v1473
                  %v1475 = vld [vmem:[%s1425 + $0xc0] sm:$0xff]
                  %1476 = vst [vmem:[%s1426 + $0xc0] sm:$0xff] %v1475
                  %v1477 = vld [vmem:[%s1425 + $0xc8] sm:$0xff]
                  %1478 = vst [vmem:[%s1426 + $0xc8] sm:$0xff] %v1477
                  %v1479 = vld [vmem:[%s1425 + $0xd0] sm:$0xff]
                  %1480 = vst [vmem:[%s1426 + $0xd0] sm:$0xff] %v1479
                  %v1481 = vld [vmem:[%s1425 + $0xd8] sm:$0xff]
                  %1482 = vst [vmem:[%s1426 + $0xd8] sm:$0xff] %v1481
                  %v1483 = vld [vmem:[%s1425 + $0xe0] sm:$0xff]
                  %1484 = vst [vmem:[%s1426 + $0xe0] sm:$0xff] %v1483
                  %v1485 = vld [vmem:[%s1425 + $0xe8] sm:$0xff]
                  %1486 = vst [vmem:[%s1426 + $0xe8] sm:$0xff] %v1485
                  %v1487 = vld [vmem:[%s1425 + $0xf0] sm:$0xff]
                  %1488 = vst [vmem:[%s1426 + $0xf0] sm:$0xff] %v1487
                  %v1489 = vld [vmem:[%s1425 + $0xf8] sm:$0xff]
                  %1490 = vst [vmem:[%s1426 + $0xf8] sm:$0xff] %v1489
                  %s1491 = sadd.s32 1, %s1424
                  %p1492 = scmp.ge.s32.totalorder %s1491, %s1417
                  %s1493 = scalar_select %p1492, 0, %s1491
                  %s1494 = smul.u32 %s1493, 256
                  %s1495 = smul.u32 %s1493, 256
                  %s1496 = scalar_lea.vmem %s1288, %s1494 [#allocation2]
                  %s1497 = scalar_lea.vmem %s1299, %s1495
                $region87: #{tpu_custom_call.1} parent=81 // loop_footer
                  %s1421 = sadd.s32 %s1419, 1
                $region88: #{tpu_custom_call.1} parent=81 // loop_footer_branch
                  %1418 = sbr.rel target = $region84
                $region89: #{tpu_custom_call.1} parent=81 // loop_exit
                  _
                %s1498 = sshrl.u32 %s1295, 5
                %s1499 = sand.u32 %s1295, 31
                %s1500 = smul.u32 %s1498, 32
                %s1501 = smul.u32 8, %s1500
                %s1502 = scalar_lea.vmem %s1288, %s1501 [#allocation2]
                %s1503 = smul.u32 8, %s1500
                %s1504 = scalar_lea.vmem %s1299, %s1503
                // While loop
                $region90: #{tpu_custom_call.1} parent=81 // loop_pre_header
                  _
                $region91: #{tpu_custom_call.1} parent=81 // loop_header
                  %s1506 = sphi 0, %s1508
                  %p1507 = scmp.ge.s32.totalorder %s1506, %s1499
                  %s1511 = sphi 0, %s1518
                  %s1512 = sphi %s1502, %s1521
                  %s1513 = sphi %s1504, %s1522
                $region92: #{tpu_custom_call.1} parent=81 // loop_header_branch
                  %1510 = sbr.rel (%p1507) target = $region96
                $region93: #{tpu_custom_call.1} parent=81 // loop_body
                  %v1514 = vld [vmem:[%s1512] sm:$0xff]
                  %1515 = vst [vmem:[%s1513] sm:$0xff] %v1514
                  %s1516 = sadd.s32 1, %s1511
                  %p1517 = scmp.ge.s32.totalorder %s1516, %s1499
                  %s1518 = scalar_select %p1517, 0, %s1516
                  %s1519 = smul.u32 %s1518, 8
                  %s1520 = smul.u32 %s1518, 8
                  %s1521 = scalar_lea.vmem %s1502, %s1519 [#allocation2]
                  %s1522 = scalar_lea.vmem %s1504, %s1520
                $region94: #{tpu_custom_call.1} parent=81 // loop_footer
                  %s1508 = sadd.s32 %s1506, 1
                $region95: #{tpu_custom_call.1} parent=81 // loop_footer_branch
                  %1505 = sbr.rel target = $region91
                $region96: #{tpu_custom_call.1} parent=81 // loop_exit
                  _
              $region82: #{tpu_custom_call.1} parent=59 // pred_fallthru
                _
              // Predicated region
              $region97: #{tpu_custom_call.1} parent=59 // pred_check
                _
              $region98: #{tpu_custom_call.1} parent=59 // pred_check_branch
                %1524 = sbr.rel target = $region100
              $region99: #{tpu_custom_call.1} parent=59 // pred_region
                _
              $region100: #{tpu_custom_call.1} parent=59 // pred_fallthru
                _
            $region60: #{tpu_custom_call.1} parent=55 // pred_fallthru
              _
            // Predicated region
            $region61: #{tpu_custom_call.1} parent=55 // pred_check
              _
            $region62: #{tpu_custom_call.1} parent=55 // pred_check_branch
              %1306 = sbr.rel target = $region64
            $region63: #{tpu_custom_call.1} parent=55 // pred_region
              %s1308 = ssub.s32 256, 1
              %s1309 = sshrl.u32 %s1295, 5
              // While loop
              $region65: #{tpu_custom_call.1} parent=63 // loop_pre_header
                _
              $region66: #{tpu_custom_call.1} parent=63 // loop_header
                %s1311 = sphi 0, %s1313
                %p1312 = scmp.ge.s32.totalorder %s1311, %s1309
                %s1316 = sphi 0, %s1385
                %s1317 = sphi %s1288, %s1388
                %s1318 = sphi %s1299, %s1389
              $region67: #{tpu_custom_call.1} parent=63 // loop_header_branch
                %1315 = sbr.rel (%p1312) target = $region71
              $region68: #{tpu_custom_call.1} parent=63 // loop_body
                %v1319 = vld [vmem:[%s1317] sm:%s1308]
                %1320 = vst [vmem:[%s1318] sm:%s1308] %v1319
                %v1321 = vld [vmem:[%s1317 + $0x8] sm:%s1308]
                %1322 = vst [vmem:[%s1318 + $0x8] sm:%s1308] %v1321
                %v1323 = vld [vmem:[%s1317 + $0x10] sm:%s1308]
                %1324 = vst [vmem:[%s1318 + $0x10] sm:%s1308] %v1323
                %v1325 = vld [vmem:[%s1317 + $0x18] sm:%s1308]
                %1326 = vst [vmem:[%s1318 + $0x18] sm:%s1308] %v1325
                %v1327 = vld [vmem:[%s1317 + $0x20] sm:%s1308]
                %1328 = vst [vmem:[%s1318 + $0x20] sm:%s1308] %v1327
                %v1329 = vld [vmem:[%s1317 + $0x28] sm:%s1308]
                %1330 = vst [vmem:[%s1318 + $0x28] sm:%s1308] %v1329
                %v1331 = vld [vmem:[%s1317 + $0x30] sm:%s1308]
                %1332 = vst [vmem:[%s1318 + $0x30] sm:%s1308] %v1331
                %v1333 = vld [vmem:[%s1317 + $0x38] sm:%s1308]
                %1334 = vst [vmem:[%s1318 + $0x38] sm:%s1308] %v1333
                %v1335 = vld [vmem:[%s1317 + $0x40] sm:%s1308]
                %1336 = vst [vmem:[%s1318 + $0x40] sm:%s1308] %v1335
                %v1337 = vld [vmem:[%s1317 + $0x48] sm:%s1308]
                %1338 = vst [vmem:[%s1318 + $0x48] sm:%s1308] %v1337
                %v1339 = vld [vmem:[%s1317 + $0x50] sm:%s1308]
                %1340 = vst [vmem:[%s1318 + $0x50] sm:%s1308] %v1339
                %v1341 = vld [vmem:[%s1317 + $0x58] sm:%s1308]
                %1342 = vst [vmem:[%s1318 + $0x58] sm:%s1308] %v1341
                %v1343 = vld [vmem:[%s1317 + $0x60] sm:%s1308]
                %1344 = vst [vmem:[%s1318 + $0x60] sm:%s1308] %v1343
                %v1345 = vld [vmem:[%s1317 + $0x68] sm:%s1308]
                %1346 = vst [vmem:[%s1318 + $0x68] sm:%s1308] %v1345
                %v1347 = vld [vmem:[%s1317 + $0x70] sm:%s1308]
                %1348 = vst [vmem:[%s1318 + $0x70] sm:%s1308] %v1347
                %v1349 = vld [vmem:[%s1317 + $0x78] sm:%s1308]
                %1350 = vst [vmem:[%s1318 + $0x78] sm:%s1308] %v1349
                %v1351 = vld [vmem:[%s1317 + $0x80] sm:%s1308]
                %1352 = vst [vmem:[%s1318 + $0x80] sm:%s1308] %v1351
                %v1353 = vld [vmem:[%s1317 + $0x88] sm:%s1308]
                %1354 = vst [vmem:[%s1318 + $0x88] sm:%s1308] %v1353
                %v1355 = vld [vmem:[%s1317 + $0x90] sm:%s1308]
                %1356 = vst [vmem:[%s1318 + $0x90] sm:%s1308] %v1355
                %v1357 = vld [vmem:[%s1317 + $0x98] sm:%s1308]
                %1358 = vst [vmem:[%s1318 + $0x98] sm:%s1308] %v1357
                %v1359 = vld [vmem:[%s1317 + $0xa0] sm:%s1308]
                %1360 = vst [vmem:[%s1318 + $0xa0] sm:%s1308] %v1359
                %v1361 = vld [vmem:[%s1317 + $0xa8] sm:%s1308]
                %1362 = vst [vmem:[%s1318 + $0xa8] sm:%s1308] %v1361
                %v1363 = vld [vmem:[%s1317 + $0xb0] sm:%s1308]
                %1364 = vst [vmem:[%s1318 + $0xb0] sm:%s1308] %v1363
                %v1365 = vld [vmem:[%s1317 + $0xb8] sm:%s1308]
                %1366 = vst [vmem:[%s1318 + $0xb8] sm:%s1308] %v1365
                %v1367 = vld [vmem:[%s1317 + $0xc0] sm:%s1308]
                %1368 = vst [vmem:[%s1318 + $0xc0] sm:%s1308] %v1367
                %v1369 = vld [vmem:[%s1317 + $0xc8] sm:%s1308]
                %1370 = vst [vmem:[%s1318 + $0xc8] sm:%s1308] %v1369
                %v1371 = vld [vmem:[%s1317 + $0xd0] sm:%s1308]
                %1372 = vst [vmem:[%s1318 + $0xd0] sm:%s1308] %v1371
                %v1373 = vld [vmem:[%s1317 + $0xd8] sm:%s1308]
                %1374 = vst [vmem:[%s1318 + $0xd8] sm:%s1308] %v1373
                %v1375 = vld [vmem:[%s1317 + $0xe0] sm:%s1308]
                %1376 = vst [vmem:[%s1318 + $0xe0] sm:%s1308] %v1375
                %v1377 = vld [vmem:[%s1317 + $0xe8] sm:%s1308]
                %1378 = vst [vmem:[%s1318 + $0xe8] sm:%s1308] %v1377
                %v1379 = vld [vmem:[%s1317 + $0xf0] sm:%s1308]
                %1380 = vst [vmem:[%s1318 + $0xf0] sm:%s1308] %v1379
                %v1381 = vld [vmem:[%s1317 + $0xf8] sm:%s1308]
                %1382 = vst [vmem:[%s1318 + $0xf8] sm:%s1308] %v1381
                %s1383 = sadd.s32 1, %s1316
                %p1384 = scmp.ge.s32.totalorder %s1383, %s1309
                %s1385 = scalar_select %p1384, 0, %s1383
                %s1386 = smul.u32 %s1385, 256
                %s1387 = smul.u32 %s1385, 256
                %s1388 = scalar_lea.vmem %s1288, %s1386 [#allocation2]
                %s1389 = scalar_lea.vmem %s1299, %s1387
              $region69: #{tpu_custom_call.1} parent=63 // loop_footer
                %s1313 = sadd.s32 %s1311, 1
              $region70: #{tpu_custom_call.1} parent=63 // loop_footer_branch
                %1310 = sbr.rel target = $region66
              $region71: #{tpu_custom_call.1} parent=63 // loop_exit
                _
              %s1390 = sshrl.u32 %s1295, 5
              %s1391 = sand.u32 %s1295, 31
              %s1392 = smul.u32 %s1390, 32
              %s1393 = smul.u32 8, %s1392
              %s1394 = scalar_lea.vmem %s1288, %s1393 [#allocation2]
              %s1395 = smul.u32 8, %s1392
              %s1396 = scalar_lea.vmem %s1299, %s1395
              // While loop
              $region72: #{tpu_custom_call.1} parent=63 // loop_pre_header
                _
              $region73: #{tpu_custom_call.1} parent=63 // loop_header
                %s1398 = sphi 0, %s1400
                %p1399 = scmp.ge.s32.totalorder %s1398, %s1391
                %s1403 = sphi 0, %s1410
                %s1404 = sphi %s1394, %s1413
                %s1405 = sphi %s1396, %s1414
              $region74: #{tpu_custom_call.1} parent=63 // loop_header_branch
                %1402 = sbr.rel (%p1399) target = $region78
              $region75: #{tpu_custom_call.1} parent=63 // loop_body
                %v1406 = vld [vmem:[%s1404] sm:%s1308]
                %1407 = vst [vmem:[%s1405] sm:%s1308] %v1406
                %s1408 = sadd.s32 1, %s1403
                %p1409 = scmp.ge.s32.totalorder %s1408, %s1391
                %s1410 = scalar_select %p1409, 0, %s1408
                %s1411 = smul.u32 %s1410, 8
                %s1412 = smul.u32 %s1410, 8
                %s1413 = scalar_lea.vmem %s1394, %s1411 [#allocation2]
                %s1414 = scalar_lea.vmem %s1396, %s1412
              $region76: #{tpu_custom_call.1} parent=63 // loop_footer
                %s1400 = sadd.s32 %s1398, 1
              $region77: #{tpu_custom_call.1} parent=63 // loop_footer_branch
                %1397 = sbr.rel target = $region73
              $region78: #{tpu_custom_call.1} parent=63 // loop_exit
                _
            $region64: #{tpu_custom_call.1} parent=55 // pred_fallthru
              _
          $region56: #{tpu_custom_call.1} parent=51 // pred_fallthru
            _
          %1525 = vnop
        $region52: #{tpu_custom_call.1} parent=47 // pred_fallthru
          _
      $region48: #{tpu_custom_call.1} parent=5 // pred_fallthru
        _
      %p1526 = scmp.le.s32.totalorder 2, %s13
      // Predicated region
      $region101: #{tpu_custom_call.1} parent=5 // pred_check
        %p1527 = pneg %p1526
      $region102: #{tpu_custom_call.1} parent=5 // pred_check_branch
        %1529 = sbr.rel (%p1527) target = $region104
      $region103: #{tpu_custom_call.1} parent=5 // pred_region
        %s1530 = ssub.s32 %s13, 2
        // Predicated region
        $region105: #{tpu_custom_call.1} parent=103 // pred_check
          %p1531 = pneg %p194
        $region106: #{tpu_custom_call.1} parent=103 // pred_check_branch
          %1533 = sbr.rel (%p1531) target = $region108
        $region107: #{tpu_custom_call.1} parent=103 // pred_region
          %s1534 = sand.u32 %s179, 1
          %s1535 = sand.u32 %s179, 1
          %s1536 = smul.addr %s1535, 256
          %s1537 = scalar_lea.vmem [#allocation2], %s1536
        $region108: #{tpu_custom_call.1} parent=103 // pred_fallthru
          _
      $region104: #{tpu_custom_call.1} parent=5 // pred_fallthru
        _
    $region6: #{tpu_custom_call.1} parent=1 // loop_footer
      %s17 = sadd.s32 1, %s13
    $region7: #{tpu_custom_call.1} parent=1 // loop_footer_branch
      %12 = sbr.rel target = $region3
    $region8: #{tpu_custom_call.1} parent=1 // loop_exit
      _

</llo_original>
